<compile_context>
chip_gen: v6e
topology: v6e:2x2x1
jax: 0.10.0
libtpu: 0.0.40
codegen_flags: <defaults>
</compile_context>

<pallas_src>
import jax
import jax.numpy as jnp
import numpy as np
from jax.experimental import pallas as pl
from jax.experimental.pallas import tpu as pltpu

INP = 2      # inp_size
HID = 64     # hid_size
OUT = 8      # out_size
SEQ = 8
BATCH = 2
PB = 8       # padded working batch (sublane width)


def lstm_fc_kernel(x_ref, h0_ref, c0_ref, wih_ref, whh_ref, b_ref,
                   wfc_ref, bfc_ref,
                   y_ref, hout_ref, cout_ref,
                   h_sc):
    # Static shapes (trace time).
    seq, batch, inp = x_ref.shape
    hid = h0_ref.shape[2]
    pb = h_sc.shape[0] // seq                 # padded batch (sublane-aligned)
    pad = pb - batch

    # --- Hoisted input projection (independent of the recurrence) ----------
    # Pad the batch dim to `pb` rows once so every per-step slice below is a
    # full, sublane-aligned tile. Padded rows never contaminate real rows
    # (matmuls and the gate math are row-wise), and are sliced off on output.
    x3 = x_ref[...]                                            # (seq, batch, inp)
    xp = jnp.concatenate(
        [x3, jnp.zeros((seq, pad, inp), x3.dtype)], axis=1)    # (seq, pb, inp)
    xp2 = xp.reshape(seq * pb, inp)                            # (seq*pb, inp)
    zx = (jnp.dot(xp2, wih_ref[...], preferred_element_type=jnp.float32)
          + b_ref[...])                                        # (seq*pb, 4*hid)

    whh = whh_ref[...]                                         # (hid, 4*hid), read once

    zeros_b = jnp.zeros((pad, hid), jnp.float32)
    h = jnp.concatenate([h0_ref[0].astype(jnp.float32), zeros_b], axis=0)  # (pb, hid)
    c = jnp.concatenate([c0_ref[0].astype(jnp.float32), zeros_b], axis=0)  # (pb, hid)

    # Fully unrolled time loop (static trip count). Only the fused recurrent
    # matmul + one tanh + a few VALU ops sit on the serial dependency chain.
    for t in range(seq):
        zx_t = zx[t * pb:(t + 1) * pb, :]                      # aligned (pb, 4*hid)
        z = zx_t + jnp.dot(h, whh, preferred_element_type=jnp.float32)
        # i/f/o columns were pre-scaled by 0.5 at pack time, so
        # sigmoid(a) = 0.5*tanh(a/2)+0.5 = 0.5*tanh(z)+0.5 for those gates,
        # while the g gate is plain tanh(z). One EUP pass over the whole block.
        tz = jnp.tanh(z)                                       # (pb, 4*hid)
        i_g = 0.5 * tz[:, 0 * hid:1 * hid] + 0.5
        f_g = 0.5 * tz[:, 1 * hid:2 * hid] + 0.5
        g_g = tz[:, 2 * hid:3 * hid]
        o_g = 0.5 * tz[:, 3 * hid:4 * hid] + 0.5
        c = f_g * c + i_g * g_g
        h = o_g * jnp.tanh(c)
        # Off-chain, sublane-aligned store of h_t for the batched fc1.
        h_sc[t * pb:(t + 1) * pb, :] = h

    # Final recurrent state (real rows only), written exactly once.
    hout_ref[0] = h[:batch, :].astype(hout_ref.dtype)
    cout_ref[0] = c[:batch, :].astype(cout_ref.dtype)

    # --- Batched fc1 over all timesteps (single matmul, single store) -------
    y = (jnp.dot(h_sc[...], wfc_ref[...], preferred_element_type=jnp.float32)
         + bfc_ref[...])                                       # (seq*pb, out)
    y_ref[...] = y.astype(y_ref.dtype)


def pack_params(w_ih, w_hh, b_ih, b_hh, w_fc, b_fc):
    """One-time weight re-layout (run at init, NOT in the per-call forward).

    PyTorch: w_ih (4*hid, inp), w_hh (4*hid, hid), gate order i, f, g, o.
    Packed:  wih_p (inp, 4*hid), whh_p (hid, 4*hid), b_p (1, 4*hid),
             with the i/f/o gate columns pre-scaled by 0.5 so that the kernel
             can implement sigmoid with a single tanh.
    """
    hid = w_hh.shape[1]
    inp = w_ih.shape[1]
    out = w_fc.shape[0]

    wih_g = w_ih.reshape(4, hid, inp)                 # (4, hid, inp)
    whh_g = w_hh.reshape(4, hid, hid)                 # (4, hid, hid)
    b_g = (b_ih + b_hh).reshape(4, hid)               # (4, hid)

    scale = jnp.array([0.5, 0.5, 1.0, 0.5], jnp.float32)   # i, f, g, o
    wih_g = wih_g * scale.reshape(4, 1, 1)
    whh_g = whh_g * scale.reshape(4, 1, 1)
    b_g = b_g * scale.reshape(4, 1)

    wih_p = wih_g.transpose(2, 0, 1).reshape(inp, 4 * hid)   # (inp, 4*hid)
    whh_p = whh_g.transpose(2, 0, 1).reshape(hid, 4 * hid)   # (hid, 4*hid)
    b_p = b_g.reshape(1, 4 * hid)

    wfc_p = w_fc.T                                    # (hid, out)
    bfc_p = b_fc.reshape(1, out)                      # (1, out)
    return wih_p, whh_p, b_p, wfc_p, bfc_p


@jax.jit
def net_forward(x, h0, c0, wih_p, whh_p, b_p, wfc_p, bfc_p):
    seq, batch, inp = x.shape
    hid = whh_p.shape[0]
    out = wfc_p.shape[1]

    vmem = lambda: pl.BlockSpec(memory_space=pltpu.MemorySpace.VMEM)

    y2, h_out, c_out = pl.pallas_call(
        lstm_fc_kernel,
        out_shape=(
            jax.ShapeDtypeStruct((seq * PB, out), x.dtype),
            jax.ShapeDtypeStruct((1, batch, hid), x.dtype),
            jax.ShapeDtypeStruct((1, batch, hid), x.dtype),
        ),
        in_specs=[vmem() for _ in range(8)],
        out_specs=(vmem(), vmem(), vmem()),
        scratch_shapes=[pltpu.VMEM((seq * PB, hid), jnp.float32)],
    )(x, h0, c0, wih_p, whh_p, b_p, wfc_p, bfc_p)

    # Drop the batch padding rows (single cheap slice per call).
    y = y2.reshape(seq, PB, out)[:, :batch, :]
    return y, (h_out, c_out)


def ref_forward(x, h0, c0, w_ih, w_hh, b_ih, b_hh, w_fc, b_fc):
    """Pure-JAX reference matching PyTorch nn.LSTM + nn.Linear semantics."""
    def step(carry, x_t):
        h, c = carry
        gates = x_t @ w_ih.T + b_ih + h @ w_hh.T + b_hh
        i, f, g, o = jnp.split(gates, 4, axis=-1)
        i = jax.nn.sigmoid(i)
        f = jax.nn.sigmoid(f)
        g = jnp.tanh(g)
        o = jax.nn.sigmoid(o)
        c_new = f * c + i * g
        h_new = o * jnp.tanh(c_new)
        return (h_new, c_new), h_new

    (h_f, c_f), hs = jax.lax.scan(step, (h0[0], c0[0]), x)
    y = hs @ w_fc.T + b_fc
    return y, (h_f[None], c_f[None])


if __name__ == "__main__":
    key = jax.random.PRNGKey(0)
    ks = jax.random.split(key, 9)
    bound = 1.0 / np.sqrt(HID)   # PyTorch default init range for LSTM/Linear

    # Parameters (deterministic synthetic init, PyTorch shape conventions)
    w_ih = jax.random.uniform(ks[0], (4 * HID, INP), jnp.float32, -bound, bound)
    w_hh = jax.random.uniform(ks[1], (4 * HID, HID), jnp.float32, -bound, bound)
    b_ih = jax.random.uniform(ks[2], (4 * HID,), jnp.float32, -bound, bound)
    b_hh = jax.random.uniform(ks[3], (4 * HID,), jnp.float32, -bound, bound)
    w_fc = jax.random.uniform(ks[4], (OUT, HID), jnp.float32, -bound, bound)
    b_fc = jax.random.uniform(ks[5], (OUT,), jnp.float32, -bound, bound)

    # Inputs
    x = jax.random.normal(ks[6], (SEQ, BATCH, INP), jnp.float32)
    h0 = jax.random.normal(ks[7], (1, BATCH, HID), jnp.float32)
    c0 = jax.random.normal(ks[8], (1, BATCH, HID), jnp.float32)

    # One-time packing (init-time, outside the per-call forward path).
    packed = pack_params(w_ih, w_hh, b_ih, b_hh, w_fc, b_fc)
    packed = jax.block_until_ready(packed)

    y, (h_n, c_n) = net_forward(x, h0, c0, *packed)
    jax.block_until_ready((y, h_n, c_n))

    y_ref, (h_ref, c_ref) = ref_forward(x, h0, c0, w_ih, w_hh, b_ih, b_hh, w_fc, b_fc)
    np.testing.assert_allclose(np.asarray(y), np.asarray(y_ref), rtol=1e-4, atol=1e-4)
    np.testing.assert_allclose(np.asarray(h_n), np.asarray(h_ref), rtol=1e-4, atol=1e-4)
    np.testing.assert_allclose(np.asarray(c_n), np.asarray(c_ref), rtol=1e-4, atol=1e-4)

    print("KERNEL_OK")
</pallas_src>

<mosaic_0001>
module attributes {stable_mosaic.version = 11 : i64} {
  func.func @lstm_fc_kernel(%arg0: memref<8x2x2xf32, #tpu.memory_space<vmem>>, %arg1: memref<1x2x64xf32, #tpu.memory_space<vmem>>, %arg2: memref<1x2x64xf32, #tpu.memory_space<vmem>>, %arg3: memref<2x256xf32, #tpu.memory_space<vmem>>, %arg4: memref<64x256xf32, #tpu.memory_space<vmem>>, %arg5: memref<1x256xf32, #tpu.memory_space<vmem>>, %arg6: memref<64x8xf32, #tpu.memory_space<vmem>>, %arg7: memref<1x8xf32, #tpu.memory_space<vmem>>, %arg8: memref<64x8xf32, #tpu.memory_space<vmem>>, %arg9: memref<1x2x64xf32, #tpu.memory_space<vmem>>, %arg10: memref<1x2x64xf32, #tpu.memory_space<vmem>>, %arg11: memref<64x64xf32, #tpu.memory_space<vmem>>) attributes {dimension_semantics = [], scalar_prefetch = 0 : i64, scratch_operands = 1 : i64, tpu.core_type = #tpu.core_type<tc>} {
    %c0 = arith.constant 0 : index
    %c0_0 = arith.constant 0 : index
    %c0_1 = arith.constant 0 : index
    %0 = vector.load %arg0[%c0, %c0_0, %c0_1] : memref<8x2x2xf32, #tpu.memory_space<vmem>>, vector<8x2x2xf32>
    %cst = arith.constant 0.000000e+00 : f32
    %1 = vector.broadcast %cst : f32 to vector<8x6x2xf32>
    %2 = tpu.concatenate %0, %1 in 1 : vector<8x2x2xf32>, vector<8x6x2xf32> -> vector<8x8x2xf32>
    %3 = vector.shape_cast %2 : vector<8x8x2xf32> to vector<64x2xf32>
    %c0_2 = arith.constant 0 : index
    %c0_3 = arith.constant 0 : index
    %4 = vector.load %arg3[%c0_2, %c0_3] : memref<2x256xf32, #tpu.memory_space<vmem>>, vector<2x256xf32>
    %cst_4 = arith.constant dense<0.000000e+00> : vector<64x256xf32>
    %5 = tpu.matmul %3, %4, %cst_4 {dimension_numbers = #tpu.dot_dimension_numbers<[1], [0], [0], [1], [0, 0, 1, 1], [], []>} : vector<64x2xf32>, vector<2x256xf32>, vector<64x256xf32> -> vector<64x256xf32>
    %c0_5 = arith.constant 0 : index
    %c0_6 = arith.constant 0 : index
    %6 = vector.load %arg5[%c0_5, %c0_6] : memref<1x256xf32, #tpu.memory_space<vmem>>, vector<1x256xf32>
    %7 = vector.broadcast %6 : vector<1x256xf32> to vector<64x256xf32>
    %8 = arith.addf %5, %7 : vector<64x256xf32>
    %c0_7 = arith.constant 0 : index
    %c0_8 = arith.constant 0 : index
    %9 = vector.load %arg4[%c0_7, %c0_8] : memref<64x256xf32, #tpu.memory_space<vmem>>, vector<64x256xf32>
    %cst_9 = arith.constant 0.000000e+00 : f32
    %10 = vector.broadcast %cst_9 : f32 to vector<6x64xf32>
    %c0_10 = arith.constant 0 : index
    %c0_11 = arith.constant 0 : index
    %c0_12 = arith.constant 0 : index
    %11 = vector.load %arg1[%c0_10, %c0_11, %c0_12] : memref<1x2x64xf32, #tpu.memory_space<vmem>>, vector<1x2x64xf32>
    %12 = vector.shape_cast %11 : vector<1x2x64xf32> to vector<2x64xf32>
    %13 = tpu.concatenate %12, %10 in 0 : vector<2x64xf32>, vector<6x64xf32> -> vector<8x64xf32>
    %c0_13 = arith.constant 0 : index
    %c0_14 = arith.constant 0 : index
    %c0_15 = arith.constant 0 : index
    %14 = vector.load %arg2[%c0_13, %c0_14, %c0_15] : memref<1x2x64xf32, #tpu.memory_space<vmem>>, vector<1x2x64xf32>
    %15 = vector.shape_cast %14 : vector<1x2x64xf32> to vector<2x64xf32>
    %16 = tpu.concatenate %15, %10 in 0 : vector<2x64xf32>, vector<6x64xf32> -> vector<8x64xf32>
    %17 = vector.extract_strided_slice %8 {offsets = [0, 0], sizes = [8, 256], strides = [1, 1]} : vector<64x256xf32> to vector<8x256xf32>
    %cst_16 = arith.constant dense<0.000000e+00> : vector<8x256xf32>
    %18 = tpu.matmul %13, %9, %cst_16 {dimension_numbers = #tpu.dot_dimension_numbers<[1], [0], [0], [1], [0, 0, 1, 1], [], []>} : vector<8x64xf32>, vector<64x256xf32>, vector<8x256xf32> -> vector<8x256xf32>
    %19 = arith.addf %17, %18 : vector<8x256xf32>
    %20 = math.tanh %19 : vector<8x256xf32>
    %21 = vector.extract_strided_slice %20 {offsets = [0, 0], sizes = [8, 64], strides = [1, 1]} : vector<8x256xf32> to vector<8x64xf32>
    %cst_17 = arith.constant 5.000000e-01 : f32
    %22 = vector.broadcast %cst_17 : f32 to vector<8x64xf32>
    %23 = arith.mulf %22, %21 : vector<8x64xf32>
    %cst_18 = arith.constant 5.000000e-01 : f32
    %24 = vector.broadcast %cst_18 : f32 to vector<8x64xf32>
    %25 = arith.addf %23, %24 : vector<8x64xf32>
    %26 = vector.extract_strided_slice %20 {offsets = [0, 64], sizes = [8, 64], strides = [1, 1]} : vector<8x256xf32> to vector<8x64xf32>
    %cst_19 = arith.constant 5.000000e-01 : f32
    %27 = vector.broadcast %cst_19 : f32 to vector<8x64xf32>
    %28 = arith.mulf %27, %26 : vector<8x64xf32>
    %cst_20 = arith.constant 5.000000e-01 : f32
    %29 = vector.broadcast %cst_20 : f32 to vector<8x64xf32>
    %30 = arith.addf %28, %29 : vector<8x64xf32>
    %31 = vector.extract_strided_slice %20 {offsets = [0, 128], sizes = [8, 64], strides = [1, 1]} : vector<8x256xf32> to vector<8x64xf32>
    %32 = vector.extract_strided_slice %20 {offsets = [0, 192], sizes = [8, 64], strides = [1, 1]} : vector<8x256xf32> to vector<8x64xf32>
    %cst_21 = arith.constant 5.000000e-01 : f32
    %33 = vector.broadcast %cst_21 : f32 to vector<8x64xf32>
    %34 = arith.mulf %33, %32 : vector<8x64xf32>
    %cst_22 = arith.constant 5.000000e-01 : f32
    %35 = vector.broadcast %cst_22 : f32 to vector<8x64xf32>
    %36 = arith.addf %34, %35 : vector<8x64xf32>
    %37 = arith.mulf %30, %16 : vector<8x64xf32>
    %38 = arith.mulf %25, %31 : vector<8x64xf32>
    %39 = arith.addf %37, %38 : vector<8x64xf32>
    %40 = math.tanh %39 : vector<8x64xf32>
    %41 = arith.mulf %36, %40 : vector<8x64xf32>
    %c0_23 = arith.constant 0 : index
    %c0_24 = arith.constant 0 : index
    %42 = vector.load %arg11[%c0_23, %c0_24] : memref<64x64xf32, #tpu.memory_space<vmem>>, vector<8x64xf32>
    tpu.vector_store %arg11[%c0_23, %c0_24], %41 {strides = array<i32>} : memref<64x64xf32, #tpu.memory_space<vmem>>, vector<8x64xf32>,
    %43 = vector.extract_strided_slice %8 {offsets = [8, 0], sizes = [8, 256], strides = [1, 1]} : vector<64x256xf32> to vector<8x256xf32>
    %cst_25 = arith.constant dense<0.000000e+00> : vector<8x256xf32>
    %44 = tpu.matmul %41, %9, %cst_25 {dimension_numbers = #tpu.dot_dimension_numbers<[1], [0], [0], [1], [0, 0, 1, 1], [], []>} : vector<8x64xf32>, vector<64x256xf32>, vector<8x256xf32> -> vector<8x256xf32>
    %45 = arith.addf %43, %44 : vector<8x256xf32>
    %46 = math.tanh %45 : vector<8x256xf32>
    %47 = vector.extract_strided_slice %46 {offsets = [0, 0], sizes = [8, 64], strides = [1, 1]} : vector<8x256xf32> to vector<8x64xf32>
    %cst_26 = arith.constant 5.000000e-01 : f32
    %48 = vector.broadcast %cst_26 : f32 to vector<8x64xf32>
    %49 = arith.mulf %48, %47 : vector<8x64xf32>
    %cst_27 = arith.constant 5.000000e-01 : f32
    %50 = vector.broadcast %cst_27 : f32 to vector<8x64xf32>
    %51 = arith.addf %49, %50 : vector<8x64xf32>
    %52 = vector.extract_strided_slice %46 {offsets = [0, 64], sizes = [8, 64], strides = [1, 1]} : vector<8x256xf32> to vector<8x64xf32>
    %cst_28 = arith.constant 5.000000e-01 : f32
    %53 = vector.broadcast %cst_28 : f32 to vector<8x64xf32>
    %54 = arith.mulf %53, %52 : vector<8x64xf32>
    %cst_29 = arith.constant 5.000000e-01 : f32
    %55 = vector.broadcast %cst_29 : f32 to vector<8x64xf32>
    %56 = arith.addf %54, %55 : vector<8x64xf32>
    %57 = vector.extract_strided_slice %46 {offsets = [0, 128], sizes = [8, 64], strides = [1, 1]} : vector<8x256xf32> to vector<8x64xf32>
    %58 = vector.extract_strided_slice %46 {offsets = [0, 192], sizes = [8, 64], strides = [1, 1]} : vector<8x256xf32> to vector<8x64xf32>
    %cst_30 = arith.constant 5.000000e-01 : f32
    %59 = vector.broadcast %cst_30 : f32 to vector<8x64xf32>
    %60 = arith.mulf %59, %58 : vector<8x64xf32>
    %cst_31 = arith.constant 5.000000e-01 : f32
    %61 = vector.broadcast %cst_31 : f32 to vector<8x64xf32>
    %62 = arith.addf %60, %61 : vector<8x64xf32>
    %63 = arith.mulf %56, %39 : vector<8x64xf32>
    %64 = arith.mulf %51, %57 : vector<8x64xf32>
    %65 = arith.addf %63, %64 : vector<8x64xf32>
    %66 = math.tanh %65 : vector<8x64xf32>
    %67 = arith.mulf %62, %66 : vector<8x64xf32>
    %c8 = arith.constant 8 : index
    %c0_32 = arith.constant 0 : index
    %68 = vector.load %arg11[%c8, %c0_32] : memref<64x64xf32, #tpu.memory_space<vmem>>, vector<8x64xf32>
    tpu.vector_store %arg11[%c8, %c0_32], %67 {strides = array<i32>} : memref<64x64xf32, #tpu.memory_space<vmem>>, vector<8x64xf32>,
    %69 = vector.extract_strided_slice %8 {offsets = [16, 0], sizes = [8, 256], strides = [1, 1]} : vector<64x256xf32> to vector<8x256xf32>
    %cst_33 = arith.constant dense<0.000000e+00> : vector<8x256xf32>
    %70 = tpu.matmul %67, %9, %cst_33 {dimension_numbers = #tpu.dot_dimension_numbers<[1], [0], [0], [1], [0, 0, 1, 1], [], []>} : vector<8x64xf32>, vector<64x256xf32>, vector<8x256xf32> -> vector<8x256xf32>
    %71 = arith.addf %69, %70 : vector<8x256xf32>
    %72 = math.tanh %71 : vector<8x256xf32>
    %73 = vector.extract_strided_slice %72 {offsets = [0, 0], sizes = [8, 64], strides = [1, 1]} : vector<8x256xf32> to vector<8x64xf32>
    %cst_34 = arith.constant 5.000000e-01 : f32
    %74 = vector.broadcast %cst_34 : f32 to vector<8x64xf32>
    %75 = arith.mulf %74, %73 : vector<8x64xf32>
    %cst_35 = arith.constant 5.000000e-01 : f32
    %76 = vector.broadcast %cst_35 : f32 to vector<8x64xf32>
    %77 = arith.addf %75, %76 : vector<8x64xf32>
    %78 = vector.extract_strided_slice %72 {offsets = [0, 64], sizes = [8, 64], strides = [1, 1]} : vector<8x256xf32> to vector<8x64xf32>
    %cst_36 = arith.constant 5.000000e-01 : f32
    %79 = vector.broadcast %cst_36 : f32 to vector<8x64xf32>
    %80 = arith.mulf %79, %78 : vector<8x64xf32>
    %cst_37 = arith.constant 5.000000e-01 : f32
    %81 = vector.broadcast %cst_37 : f32 to vector<8x64xf32>
    %82 = arith.addf %80, %81 : vector<8x64xf32>
    %83 = vector.extract_strided_slice %72 {offsets = [0, 128], sizes = [8, 64], strides = [1, 1]} : vector<8x256xf32> to vector<8x64xf32>
    %84 = vector.extract_strided_slice %72 {offsets = [0, 192], sizes = [8, 64], strides = [1, 1]} : vector<8x256xf32> to vector<8x64xf32>
    %cst_38 = arith.constant 5.000000e-01 : f32
    %85 = vector.broadcast %cst_38 : f32 to vector<8x64xf32>
    %86 = arith.mulf %85, %84 : vector<8x64xf32>
    %cst_39 = arith.constant 5.000000e-01 : f32
    %87 = vector.broadcast %cst_39 : f32 to vector<8x64xf32>
    %88 = arith.addf %86, %87 : vector<8x64xf32>
    %89 = arith.mulf %82, %65 : vector<8x64xf32>
    %90 = arith.mulf %77, %83 : vector<8x64xf32>
    %91 = arith.addf %89, %90 : vector<8x64xf32>
    %92 = math.tanh %91 : vector<8x64xf32>
    %93 = arith.mulf %88, %92 : vector<8x64xf32>
    %c16 = arith.constant 16 : index
    %c0_40 = arith.constant 0 : index
    %94 = vector.load %arg11[%c16, %c0_40] : memref<64x64xf32, #tpu.memory_space<vmem>>, vector<8x64xf32>
    tpu.vector_store %arg11[%c16, %c0_40], %93 {strides = array<i32>} : memref<64x64xf32, #tpu.memory_space<vmem>>, vector<8x64xf32>,
    %95 = vector.extract_strided_slice %8 {offsets = [24, 0], sizes = [8, 256], strides = [1, 1]} : vector<64x256xf32> to vector<8x256xf32>
    %cst_41 = arith.constant dense<0.000000e+00> : vector<8x256xf32>
    %96 = tpu.matmul %93, %9, %cst_41 {dimension_numbers = #tpu.dot_dimension_numbers<[1], [0], [0], [1], [0, 0, 1, 1], [], []>} : vector<8x64xf32>, vector<64x256xf32>, vector<8x256xf32> -> vector<8x256xf32>
    %97 = arith.addf %95, %96 : vector<8x256xf32>
    %98 = math.tanh %97 : vector<8x256xf32>
    %99 = vector.extract_strided_slice %98 {offsets = [0, 0], sizes = [8, 64], strides = [1, 1]} : vector<8x256xf32> to vector<8x64xf32>
    %cst_42 = arith.constant 5.000000e-01 : f32
    %100 = vector.broadcast %cst_42 : f32 to vector<8x64xf32>
    %101 = arith.mulf %100, %99 : vector<8x64xf32>
    %cst_43 = arith.constant 5.000000e-01 : f32
    %102 = vector.broadcast %cst_43 : f32 to vector<8x64xf32>
    %103 = arith.addf %101, %102 : vector<8x64xf32>
    %104 = vector.extract_strided_slice %98 {offsets = [0, 64], sizes = [8, 64], strides = [1, 1]} : vector<8x256xf32> to vector<8x64xf32>
    %cst_44 = arith.constant 5.000000e-01 : f32
    %105 = vector.broadcast %cst_44 : f32 to vector<8x64xf32>
    %106 = arith.mulf %105, %104 : vector<8x64xf32>
    %cst_45 = arith.constant 5.000000e-01 : f32
    %107 = vector.broadcast %cst_45 : f32 to vector<8x64xf32>
    %108 = arith.addf %106, %107 : vector<8x64xf32>
    %109 = vector.extract_strided_slice %98 {offsets = [0, 128], sizes = [8, 64], strides = [1, 1]} : vector<8x256xf32> to vector<8x64xf32>
    %110 = vector.extract_strided_slice %98 {offsets = [0, 192], sizes = [8, 64], strides = [1, 1]} : vector<8x256xf32> to vector<8x64xf32>
    %cst_46 = arith.constant 5.000000e-01 : f32
    %111 = vector.broadcast %cst_46 : f32 to vector<8x64xf32>
    %112 = arith.mulf %111, %110 : vector<8x64xf32>
    %cst_47 = arith.constant 5.000000e-01 : f32
    %113 = vector.broadcast %cst_47 : f32 to vector<8x64xf32>
    %114 = arith.addf %112, %113 : vector<8x64xf32>
    %115 = arith.mulf %108, %91 : vector<8x64xf32>
    %116 = arith.mulf %103, %109 : vector<8x64xf32>
    %117 = arith.addf %115, %116 : vector<8x64xf32>
    %118 = math.tanh %117 : vector<8x64xf32>
    %119 = arith.mulf %114, %118 : vector<8x64xf32>
    %c24 = arith.constant 24 : index
    %c0_48 = arith.constant 0 : index
    %120 = vector.load %arg11[%c24, %c0_48] : memref<64x64xf32, #tpu.memory_space<vmem>>, vector<8x64xf32>
    tpu.vector_store %arg11[%c24, %c0_48], %119 {strides = array<i32>} : memref<64x64xf32, #tpu.memory_space<vmem>>, vector<8x64xf32>,
    %121 = vector.extract_strided_slice %8 {offsets = [32, 0], sizes = [8, 256], strides = [1, 1]} : vector<64x256xf32> to vector<8x256xf32>
    %cst_49 = arith.constant dense<0.000000e+00> : vector<8x256xf32>
    %122 = tpu.matmul %119, %9, %cst_49 {dimension_numbers = #tpu.dot_dimension_numbers<[1], [0], [0], [1], [0, 0, 1, 1], [], []>} : vector<8x64xf32>, vector<64x256xf32>, vector<8x256xf32> -> vector<8x256xf32>
    %123 = arith.addf %121, %122 : vector<8x256xf32>
    %124 = math.tanh %123 : vector<8x256xf32>
    %125 = vector.extract_strided_slice %124 {offsets = [0, 0], sizes = [8, 64], strides = [1, 1]} : vector<8x256xf32> to vector<8x64xf32>
    %cst_50 = arith.constant 5.000000e-01 : f32
    %126 = vector.broadcast %cst_50 : f32 to vector<8x64xf32>
    %127 = arith.mulf %126, %125 : vector<8x64xf32>
    %cst_51 = arith.constant 5.000000e-01 : f32
    %128 = vector.broadcast %cst_51 : f32 to vector<8x64xf32>
    %129 = arith.addf %127, %128 : vector<8x64xf32>
    %130 = vector.extract_strided_slice %124 {offsets = [0, 64], sizes = [8, 64], strides = [1, 1]} : vector<8x256xf32> to vector<8x64xf32>
    %cst_52 = arith.constant 5.000000e-01 : f32
    %131 = vector.broadcast %cst_52 : f32 to vector<8x64xf32>
    %132 = arith.mulf %131, %130 : vector<8x64xf32>
    %cst_53 = arith.constant 5.000000e-01 : f32
    %133 = vector.broadcast %cst_53 : f32 to vector<8x64xf32>
    %134 = arith.addf %132, %133 : vector<8x64xf32>
    %135 = vector.extract_strided_slice %124 {offsets = [0, 128], sizes = [8, 64], strides = [1, 1]} : vector<8x256xf32> to vector<8x64xf32>
    %136 = vector.extract_strided_slice %124 {offsets = [0, 192], sizes = [8, 64], strides = [1, 1]} : vector<8x256xf32> to vector<8x64xf32>
    %cst_54 = arith.constant 5.000000e-01 : f32
    %137 = vector.broadcast %cst_54 : f32 to vector<8x64xf32>
    %138 = arith.mulf %137, %136 : vector<8x64xf32>
    %cst_55 = arith.constant 5.000000e-01 : f32
    %139 = vector.broadcast %cst_55 : f32 to vector<8x64xf32>
    %140 = arith.addf %138, %139 : vector<8x64xf32>
    %141 = arith.mulf %134, %117 : vector<8x64xf32>
    %142 = arith.mulf %129, %135 : vector<8x64xf32>
    %143 = arith.addf %141, %142 : vector<8x64xf32>
    %144 = math.tanh %143 : vector<8x64xf32>
    %145 = arith.mulf %140, %144 : vector<8x64xf32>
    %c32 = arith.constant 32 : index
    %c0_56 = arith.constant 0 : index
    %146 = vector.load %arg11[%c32, %c0_56] : memref<64x64xf32, #tpu.memory_space<vmem>>, vector<8x64xf32>
    tpu.vector_store %arg11[%c32, %c0_56], %145 {strides = array<i32>} : memref<64x64xf32, #tpu.memory_space<vmem>>, vector<8x64xf32>,
    %147 = vector.extract_strided_slice %8 {offsets = [40, 0], sizes = [8, 256], strides = [1, 1]} : vector<64x256xf32> to vector<8x256xf32>
    %cst_57 = arith.constant dense<0.000000e+00> : vector<8x256xf32>
    %148 = tpu.matmul %145, %9, %cst_57 {dimension_numbers = #tpu.dot_dimension_numbers<[1], [0], [0], [1], [0, 0, 1, 1], [], []>} : vector<8x64xf32>, vector<64x256xf32>, vector<8x256xf32> -> vector<8x256xf32>
    %149 = arith.addf %147, %148 : vector<8x256xf32>
    %150 = math.tanh %149 : vector<8x256xf32>
    %151 = vector.extract_strided_slice %150 {offsets = [0, 0], sizes = [8, 64], strides = [1, 1]} : vector<8x256xf32> to vector<8x64xf32>
    %cst_58 = arith.constant 5.000000e-01 : f32
    %152 = vector.broadcast %cst_58 : f32 to vector<8x64xf32>
    %153 = arith.mulf %152, %151 : vector<8x64xf32>
    %cst_59 = arith.constant 5.000000e-01 : f32
    %154 = vector.broadcast %cst_59 : f32 to vector<8x64xf32>
    %155 = arith.addf %153, %154 : vector<8x64xf32>
    %156 = vector.extract_strided_slice %150 {offsets = [0, 64], sizes = [8, 64], strides = [1, 1]} : vector<8x256xf32> to vector<8x64xf32>
    %cst_60 = arith.constant 5.000000e-01 : f32
    %157 = vector.broadcast %cst_60 : f32 to vector<8x64xf32>
    %158 = arith.mulf %157, %156 : vector<8x64xf32>
    %cst_61 = arith.constant 5.000000e-01 : f32
    %159 = vector.broadcast %cst_61 : f32 to vector<8x64xf32>
    %160 = arith.addf %158, %159 : vector<8x64xf32>
    %161 = vector.extract_strided_slice %150 {offsets = [0, 128], sizes = [8, 64], strides = [1, 1]} : vector<8x256xf32> to vector<8x64xf32>
    %162 = vector.extract_strided_slice %150 {offsets = [0, 192], sizes = [8, 64], strides = [1, 1]} : vector<8x256xf32> to vector<8x64xf32>
    %cst_62 = arith.constant 5.000000e-01 : f32
    %163 = vector.broadcast %cst_62 : f32 to vector<8x64xf32>
    %164 = arith.mulf %163, %162 : vector<8x64xf32>
    %cst_63 = arith.constant 5.000000e-01 : f32
    %165 = vector.broadcast %cst_63 : f32 to vector<8x64xf32>
    %166 = arith.addf %164, %165 : vector<8x64xf32>
    %167 = arith.mulf %160, %143 : vector<8x64xf32>
    %168 = arith.mulf %155, %161 : vector<8x64xf32>
    %169 = arith.addf %167, %168 : vector<8x64xf32>
    %170 = math.tanh %169 : vector<8x64xf32>
    %171 = arith.mulf %166, %170 : vector<8x64xf32>
    %c40 = arith.constant 40 : index
    %c0_64 = arith.constant 0 : index
    %172 = vector.load %arg11[%c40, %c0_64] : memref<64x64xf32, #tpu.memory_space<vmem>>, vector<8x64xf32>
    tpu.vector_store %arg11[%c40, %c0_64], %171 {strides = array<i32>} : memref<64x64xf32, #tpu.memory_space<vmem>>, vector<8x64xf32>,
    %173 = vector.extract_strided_slice %8 {offsets = [48, 0], sizes = [8, 256], strides = [1, 1]} : vector<64x256xf32> to vector<8x256xf32>
    %cst_65 = arith.constant dense<0.000000e+00> : vector<8x256xf32>
    %174 = tpu.matmul %171, %9, %cst_65 {dimension_numbers = #tpu.dot_dimension_numbers<[1], [0], [0], [1], [0, 0, 1, 1], [], []>} : vector<8x64xf32>, vector<64x256xf32>, vector<8x256xf32> -> vector<8x256xf32>
    %175 = arith.addf %173, %174 : vector<8x256xf32>
    %176 = math.tanh %175 : vector<8x256xf32>
    %177 = vector.extract_strided_slice %176 {offsets = [0, 0], sizes = [8, 64], strides = [1, 1]} : vector<8x256xf32> to vector<8x64xf32>
    %cst_66 = arith.constant 5.000000e-01 : f32
    %178 = vector.broadcast %cst_66 : f32 to vector<8x64xf32>
    %179 = arith.mulf %178, %177 : vector<8x64xf32>
    %cst_67 = arith.constant 5.000000e-01 : f32
    %180 = vector.broadcast %cst_67 : f32 to vector<8x64xf32>
    %181 = arith.addf %179, %180 : vector<8x64xf32>
    %182 = vector.extract_strided_slice %176 {offsets = [0, 64], sizes = [8, 64], strides = [1, 1]} : vector<8x256xf32> to vector<8x64xf32>
    %cst_68 = arith.constant 5.000000e-01 : f32
    %183 = vector.broadcast %cst_68 : f32 to vector<8x64xf32>
    %184 = arith.mulf %183, %182 : vector<8x64xf32>
    %cst_69 = arith.constant 5.000000e-01 : f32
    %185 = vector.broadcast %cst_69 : f32 to vector<8x64xf32>
    %186 = arith.addf %184, %185 : vector<8x64xf32>
    %187 = vector.extract_strided_slice %176 {offsets = [0, 128], sizes = [8, 64], strides = [1, 1]} : vector<8x256xf32> to vector<8x64xf32>
    %188 = vector.extract_strided_slice %176 {offsets = [0, 192], sizes = [8, 64], strides = [1, 1]} : vector<8x256xf32> to vector<8x64xf32>
    %cst_70 = arith.constant 5.000000e-01 : f32
    %189 = vector.broadcast %cst_70 : f32 to vector<8x64xf32>
    %190 = arith.mulf %189, %188 : vector<8x64xf32>
    %cst_71 = arith.constant 5.000000e-01 : f32
    %191 = vector.broadcast %cst_71 : f32 to vector<8x64xf32>
    %192 = arith.addf %190, %191 : vector<8x64xf32>
    %193 = arith.mulf %186, %169 : vector<8x64xf32>
    %194 = arith.mulf %181, %187 : vector<8x64xf32>
    %195 = arith.addf %193, %194 : vector<8x64xf32>
    %196 = math.tanh %195 : vector<8x64xf32>
    %197 = arith.mulf %192, %196 : vector<8x64xf32>
    %c48 = arith.constant 48 : index
    %c0_72 = arith.constant 0 : index
    %198 = vector.load %arg11[%c48, %c0_72] : memref<64x64xf32, #tpu.memory_space<vmem>>, vector<8x64xf32>
    tpu.vector_store %arg11[%c48, %c0_72], %197 {strides = array<i32>} : memref<64x64xf32, #tpu.memory_space<vmem>>, vector<8x64xf32>,
    %199 = vector.extract_strided_slice %8 {offsets = [56, 0], sizes = [8, 256], strides = [1, 1]} : vector<64x256xf32> to vector<8x256xf32>
    %cst_73 = arith.constant dense<0.000000e+00> : vector<8x256xf32>
    %200 = tpu.matmul %197, %9, %cst_73 {dimension_numbers = #tpu.dot_dimension_numbers<[1], [0], [0], [1], [0, 0, 1, 1], [], []>} : vector<8x64xf32>, vector<64x256xf32>, vector<8x256xf32> -> vector<8x256xf32>
    %201 = arith.addf %199, %200 : vector<8x256xf32>
    %202 = math.tanh %201 : vector<8x256xf32>
    %203 = vector.extract_strided_slice %202 {offsets = [0, 0], sizes = [8, 64], strides = [1, 1]} : vector<8x256xf32> to vector<8x64xf32>
    %cst_74 = arith.constant 5.000000e-01 : f32
    %204 = vector.broadcast %cst_74 : f32 to vector<8x64xf32>
    %205 = arith.mulf %204, %203 : vector<8x64xf32>
    %cst_75 = arith.constant 5.000000e-01 : f32
    %206 = vector.broadcast %cst_75 : f32 to vector<8x64xf32>
    %207 = arith.addf %205, %206 : vector<8x64xf32>
    %208 = vector.extract_strided_slice %202 {offsets = [0, 64], sizes = [8, 64], strides = [1, 1]} : vector<8x256xf32> to vector<8x64xf32>
    %cst_76 = arith.constant 5.000000e-01 : f32
    %209 = vector.broadcast %cst_76 : f32 to vector<8x64xf32>
    %210 = arith.mulf %209, %208 : vector<8x64xf32>
    %cst_77 = arith.constant 5.000000e-01 : f32
    %211 = vector.broadcast %cst_77 : f32 to vector<8x64xf32>
    %212 = arith.addf %210, %211 : vector<8x64xf32>
    %213 = vector.extract_strided_slice %202 {offsets = [0, 128], sizes = [8, 64], strides = [1, 1]} : vector<8x256xf32> to vector<8x64xf32>
    %214 = vector.extract_strided_slice %202 {offsets = [0, 192], sizes = [8, 64], strides = [1, 1]} : vector<8x256xf32> to vector<8x64xf32>
    %cst_78 = arith.constant 5.000000e-01 : f32
    %215 = vector.broadcast %cst_78 : f32 to vector<8x64xf32>
    %216 = arith.mulf %215, %214 : vector<8x64xf32>
    %cst_79 = arith.constant 5.000000e-01 : f32
    %217 = vector.broadcast %cst_79 : f32 to vector<8x64xf32>
    %218 = arith.addf %216, %217 : vector<8x64xf32>
    %219 = arith.mulf %212, %195 : vector<8x64xf32>
    %220 = arith.mulf %207, %213 : vector<8x64xf32>
    %221 = arith.addf %219, %220 : vector<8x64xf32>
    %222 = math.tanh %221 : vector<8x64xf32>
    %223 = arith.mulf %218, %222 : vector<8x64xf32>
    %c56 = arith.constant 56 : index
    %c0_80 = arith.constant 0 : index
    %224 = vector.load %arg11[%c56, %c0_80] : memref<64x64xf32, #tpu.memory_space<vmem>>, vector<8x64xf32>
    tpu.vector_store %arg11[%c56, %c0_80], %223 {strides = array<i32>} : memref<64x64xf32, #tpu.memory_space<vmem>>, vector<8x64xf32>,
    %225 = vector.extract_strided_slice %223 {offsets = [0, 0], sizes = [2, 64], strides = [1, 1]} : vector<8x64xf32> to vector<2x64xf32>
    %c0_81 = arith.constant 0 : index
    %c0_82 = arith.constant 0 : index
    %c0_83 = arith.constant 0 : index
    %226 = vector.load %arg9[%c0_81, %c0_82, %c0_83] : memref<1x2x64xf32, #tpu.memory_space<vmem>>, vector<1x2x64xf32>
    %227 = vector.shape_cast %226 : vector<1x2x64xf32> to vector<2x64xf32>
    %228 = vector.shape_cast %225 : vector<2x64xf32> to vector<1x2x64xf32>
    tpu.vector_store %arg9[%c0_81, %c0_82, %c0_83], %228 {strides = array<i32>} : memref<1x2x64xf32, #tpu.memory_space<vmem>>, vector<1x2x64xf32>,
    %229 = vector.extract_strided_slice %221 {offsets = [0, 0], sizes = [2, 64], strides = [1, 1]} : vector<8x64xf32> to vector<2x64xf32>
    %c0_84 = arith.constant 0 : index
    %c0_85 = arith.constant 0 : index
    %c0_86 = arith.constant 0 : index
    %230 = vector.load %arg10[%c0_84, %c0_85, %c0_86] : memref<1x2x64xf32, #tpu.memory_space<vmem>>, vector<1x2x64xf32>
    %231 = vector.shape_cast %230 : vector<1x2x64xf32> to vector<2x64xf32>
    %232 = vector.shape_cast %229 : vector<2x64xf32> to vector<1x2x64xf32>
    tpu.vector_store %arg10[%c0_84, %c0_85, %c0_86], %232 {strides = array<i32>} : memref<1x2x64xf32, #tpu.memory_space<vmem>>, vector<1x2x64xf32>,
    %c0_87 = arith.constant 0 : index
    %c0_88 = arith.constant 0 : index
    %233 = vector.load %arg11[%c0_87, %c0_88] : memref<64x64xf32, #tpu.memory_space<vmem>>, vector<64x64xf32>
    %c0_89 = arith.constant 0 : index
    %c0_90 = arith.constant 0 : index
    %234 = vector.load %arg6[%c0_89, %c0_90] : memref<64x8xf32, #tpu.memory_space<vmem>>, vector<64x8xf32>
    %cst_91 = arith.constant dense<0.000000e+00> : vector<64x8xf32>
    %235 = tpu.matmul %233, %234, %cst_91 {dimension_numbers = #tpu.dot_dimension_numbers<[1], [0], [0], [1], [0, 0, 1, 1], [], []>} : vector<64x64xf32>, vector<64x8xf32>, vector<64x8xf32> -> vector<64x8xf32>
    %c0_92 = arith.constant 0 : index
    %c0_93 = arith.constant 0 : index
    %236 = vector.load %arg7[%c0_92, %c0_93] : memref<1x8xf32, #tpu.memory_space<vmem>>, vector<1x8xf32>
    %237 = vector.broadcast %236 : vector<1x8xf32> to vector<64x8xf32>
    %238 = arith.addf %235, %237 : vector<64x8xf32>
    %c0_94 = arith.constant 0 : index
    %c0_95 = arith.constant 0 : index
    %239 = vector.load %arg8[%c0_94, %c0_95] : memref<64x8xf32, #tpu.memory_space<vmem>>, vector<64x8xf32>
    tpu.vector_store %arg8[%c0_94, %c0_95], %238 {strides = array<i32>} : memref<64x8xf32, #tpu.memory_space<vmem>>, vector<64x8xf32>,
    return
  }
}

</mosaic_0001>

<llo_original>
// kernel: net_forward.1
$region0: #{net_forward.1}
  #allocation0 [shape = 'u32[]', space=smem, size = 0x4, offset = 0x4, fixed_abs, tag = 'smem constant byte address 0x4 - core index']
  #allocation1 [shape = 'u32[144,128]{1,0:T(1,128)}', space=vmem, size = 0x12000, scoped, tag = 'internal scratch']
  #allocation2 [shape = 'f32[64,64]{1,0:T(8,128)}', space=vmem, size = 0x8000, scoped, tag = 'scratch operand']
  %s0 = inlined_call_operand.vmem [shape: f32[8,2,2], index: 0, kind: input, shape index: {}]
  %s1 = inlined_call_operand.vmem [shape: f32[1,2,64], index: 1, kind: input, shape index: {}]
  %s2 = inlined_call_operand.vmem [shape: f32[1,2,64], index: 2, kind: input, shape index: {}]
  %s3 = inlined_call_operand.vmem [shape: f32[2,256], index: 3, kind: input, shape index: {}]
  %s4 = inlined_call_operand.hbm [shape: f32[64,256], index: 4, kind: input, shape index: {}]
  %s5 = inlined_call_operand.vmem [shape: f32[1,256], index: 5, kind: input, shape index: {}]
  %s6 = inlined_call_operand.vmem [shape: f32[64,8], index: 6, kind: input, shape index: {}]
  %s7 = inlined_call_operand.vmem [shape: f32[1,8], index: 7, kind: input, shape index: {}]
  %s8 = inlined_call_operand.vmem [shape: f32[64,8], index: 8, kind: output, shape index: {0}]
  %s9 = inlined_call_operand.hbm [shape: f32[1,2,64], index: 9, kind: output, shape index: {1}]
  %s10 = inlined_call_operand.hbm [shape: f32[1,2,64], index: 10, kind: output, shape index: {2}]
  %11 = xla_tuple %s8, %s9, %s10
  %s12 = sld [smem:[#allocation0]]
  $region62: #{net_forward.1} parent=0
    _
  %s14 = ssub.s32 1, %s12
  %s15 = scalar_select 0, %s14, %s12
  $region1: #{net_forward.1} parent=0
    #allocation3 [shape = 'u8[65536]{0}', space=vmem, size = 0x10000, scoped, tag = 'input window, operand 4, single buffered']
    #allocation4 [shape = 's32[1]{0}', space=sflag, size = 0x4, scoped, tag = 'scoped memory for net_forward.1']
    #allocation5 [shape = 's32[1]{0}', space=sflag, size = 0x4, scoped, tag = 'scoped memory for net_forward.1']
    #allocation6 [shape = 'u8[1024]{0}', space=vmem, size = 0x400, scoped, tag = 'output window, operand 1, single buffered']
    #allocation7 [shape = 'u8[1024]{0}', space=vmem, size = 0x400, scoped, tag = 'output window, operand 2, single buffered']
    #allocation8 [shape = 's32[1]{0}', space=sflag, size = 0x4, scoped, tag = 'scoped memory for net_forward.1']
    %16 = vsyncpa [#allocation4], 0
    %17 = vsyncpa [#allocation5], 0
    %18 = vsyncpa [#allocation8], 0
    // Predicated region
    $region2: #{net_forward.1} parent=1 // pred_check
      _
    $region3: #{net_forward.1} parent=1 // pred_check_branch
      %20 = sbr.rel (0) target = $region5
    $region4: #{net_forward.1} parent=1 // pred_region
      _
    $region5: #{net_forward.1} parent=1 // pred_fallthru
      _
    // Predicated region
    $region6: #{net_forward.1} parent=1 // pred_check
      _
    $region7: #{net_forward.1} parent=1 // pred_check_branch
      %22 = sbr.rel (0) target = $region9
    $region8: #{net_forward.1} parent=1 // pred_region
      _
    $region9: #{net_forward.1} parent=1 // pred_fallthru
      _
    // Predicated region
    $region10: #{net_forward.1} parent=1 // pred_check
      _
    $region11: #{net_forward.1} parent=1 // pred_check_branch
      %24 = sbr.rel (0) target = $region13
    $region12: #{net_forward.1} parent=1 // pred_region
      _
    $region13: #{net_forward.1} parent=1 // pred_fallthru
      _
    // Predicated region
    $region14: #{net_forward.1} parent=1 // pred_check
      _
    $region15: #{net_forward.1} parent=1 // pred_check_branch
      %26 = sbr.rel (0) target = $region17
    $region16: #{net_forward.1} parent=1 // pred_region
      _
    $region17: #{net_forward.1} parent=1 // pred_fallthru
      _
    // Predicated region
    $region18: #{net_forward.1} parent=1 // pred_check
      _
    $region19: #{net_forward.1} parent=1 // pred_check_branch
      %28 = sbr.rel (0) target = $region21
    $region20: #{net_forward.1} parent=1 // pred_region
      %s30 = ssub.s32 2048, 2048
      %31 = vsyncadd [#allocation4], %s30
      %s32 = sshll.u32 [#allocation3], 4
      %s33 = int_to_ptr.vmem [resolvable:$true] %s32
      %38 = dma.hbm_to_vmem [thread:$0]  %s4, 2048, %s33, [#allocation4], 256, 256, 16
    $region21: #{net_forward.1} parent=1 // pred_fallthru
      _
    // Predicated region
    $region22: #{net_forward.1} parent=1 // pred_check
      _
    $region23: #{net_forward.1} parent=1 // pred_check_branch
      %40 = sbr.rel (0) target = $region25
    $region24: #{net_forward.1} parent=1 // pred_region
      _
    $region25: #{net_forward.1} parent=1 // pred_fallthru
      _
    // Predicated region
    $region26: #{net_forward.1} parent=1 // pred_check
      _
    $region27: #{net_forward.1} parent=1 // pred_check_branch
      %42 = sbr.rel (0) target = $region29
    $region28: #{net_forward.1} parent=1 // pred_region
      _
    $region29: #{net_forward.1} parent=1 // pred_fallthru
      _
    // Predicated region
    $region30: #{net_forward.1} parent=1 // pred_check
      _
    $region31: #{net_forward.1} parent=1 // pred_check_branch
      %44 = sbr.rel (0) target = $region33
    $region32: #{net_forward.1} parent=1 // pred_region
      _
    $region33: #{net_forward.1} parent=1 // pred_fallthru
      _
    // Predicated region
    $region34: #{net_forward.1} parent=1 // pred_check
      _
    $region35: #{net_forward.1} parent=1 // pred_check_branch
      %46 = sbr.rel (0) target = $region37
    $region36: #{net_forward.1} parent=1 // pred_region
      %47 = dma.done [#allocation4], 2048
    $region37: #{net_forward.1} parent=1 // pred_fallthru
      _
    %v48 = vld [vmem:[%s0] sm:$0x3]
    %v49 = vld [vmem:[%s0 + $0x2] sm:$0x3]
    %v50 = vld [vmem:[%s0 + $0x4] sm:$0x3]
    %v51 = vld [vmem:[%s0 + $0x6] sm:$0x3]
    %v52 = vld [vmem:[%s0 + $0x8] sm:$0x3]
    %v53 = vld [vmem:[%s0 + $0xa] sm:$0x3]
    %v54 = vld [vmem:[%s0 + $0xc] sm:$0x3]
    %v55 = vld [vmem:[%s0 + $0xe] sm:$0x3]
    %vm56 = vcmask 1041408
    %v57 = vsel %vm56, %v48, 0.0
    %v58 = vsel %vm56, %v49, 0.0
    %v59 = vsel %vm56, %v50, 0.0
    %v60 = vsel %vm56, %v51, 0.0
    %v61 = vsel %vm56, %v52, 0.0
    %v62 = vsel %vm56, %v53, 0.0
    %v63 = vsel %vm56, %v54, 0.0
    %v64 = vsel %vm56, %v55, 0.0
    %v65 = vld [vmem:[%s3] sm:$0xf]
    %v66 = vld [vmem:[%s5] sm:$0x3]
    %v68 = vlaneseq
    %v69 = vshrl.u32 %v68, 7
    %v70 = vsub.s32 0, %v69
    %v71 = vrot.slane %v66, %v70
    %v72 = vlaneseq
    %v73 = vshrl.u32 %v72, 7
    %v74 = vsub.s32 1, %v73
    %v75 = vrot.slane %v66, %v74
    %v80 = vunpack.c.l.s4 1983009808
    %v81 = vunpack.c.0.s8 %v80
    %v82 = vlaneseq
    %v83 = vshrl.u32 %v82, 7
    %v84 = vsub.s32 %v81, %v83
    %v85 = vrot.slane %v65, %v84
    %v86 = vcombine.high %v85, %v85
    %vm87 = vcmask 15360
    %v89 = vsel %vm87, %v57, 0
    %v92 = vsel %vm87, %v58, 0
    %v95 = vsel %vm87, %v59, 0
    %v98 = vsel %vm87, %v60, 0
    %v101 = vsel %vm87, %v61, 0
    %v104 = vsel %vm87, %v62, 0
    %v107 = vsel %vm87, %v63, 0
    %v110 = vsel %vm87, %v64, 0
    %v112 = vsel %vm56, %v85, 0
    %v114 = vsel %vm56, %v86, 0
    %116 = vmatprep.subr.mxu0 0.0
    %117 = vmatpush1.msra.mxu0 0.0
    %118 = vmatprep.subr.mxu0 0.0
    %119 = vmatpush1.msra.mxu0 0.0
    %120 = vmatprep.subr.mxu0 0.0
    %121 = vmatpush1.msra.mxu0 0.0
    %122 = vmatprep.subr.mxu0 0.0
    %123 = vmatpush1.msra.mxu0 0.0
    %124 = vmatprep.subr.mxu0 0.0
    %125 = vmatpush1.msra.mxu0 0.0
    %126 = vmatprep.subr.mxu0 0.0
    %127 = vmatpush1.msra.mxu0 0.0
    %128 = vmatprep.subr.mxu0 0.0
    %129 = vmatpush1.msra.mxu0 0.0
    %130 = vmatprep.subr.mxu0 0.0
    %131 = vmatpush1.msra.mxu0 0.0
    %132 = vmatprep.subr.mxu0 0.0
    %133 = vmatpush1.msra.mxu0 0.0
    %134 = vmatprep.subr.mxu0 0.0
    %135 = vmatpush1.msra.mxu0 0.0
    %136 = vmatprep.subr.mxu0 0.0
    %137 = vmatpush1.msra.mxu0 0.0
    %138 = vmatprep.subr.mxu0 0.0
    %139 = vmatpush1.msra.mxu0 0.0
    %140 = vmatprep.subr.mxu0 0.0
    %141 = vmatpush1.msra.mxu0 0.0
    %142 = vmatprep.subr.mxu0 0.0
    %143 = vmatpush1.msra.mxu0 0.0
    %144 = vmatprep.subr.mxu0 0.0
    %145 = vmatpush1.msra.mxu0 0.0
    %146 = vmatprep.subr.mxu0 %v114
    %147 = vmatpush1.msra.mxu0 %v112
    %148 = vmatprep.subr.mxu0 0.0
    %149 = vmatpush2.msra.mxu0 0.0
    %150 = vmatprep.subr.mxu0 0.0
    %151 = vmatpush2.msra.mxu0 0.0
    %152 = vmatprep.subr.mxu0 0.0
    %153 = vmatpush2.msra.mxu0 0.0
    %154 = vmatprep.subr.mxu0 0.0
    %155 = vmatpush2.msra.mxu0 0.0
    %156 = vmatprep.subr.mxu0 0.0
    %157 = vmatpush2.msra.mxu0 0.0
    %158 = vmatprep.subr.mxu0 0.0
    %159 = vmatpush2.msra.mxu0 0.0
    %160 = vmatprep.subr.mxu0 0.0
    %161 = vmatpush2.msra.mxu0 0.0
    %162 = vmatprep.subr.mxu0 0.0
    %163 = vmatpush2.msra.mxu0 0.0
    %164 = vmatprep.subr.mxu0 0.0
    %165 = vmatpush2.msra.mxu0 0.0
    %166 = vmatprep.subr.mxu0 0.0
    %167 = vmatpush2.msra.mxu0 0.0
    %168 = vmatprep.subr.mxu0 0.0
    %169 = vmatpush2.msra.mxu0 0.0
    %170 = vmatprep.subr.mxu0 0.0
    %171 = vmatpush2.msra.mxu0 0.0
    %172 = vmatprep.subr.mxu0 0.0
    %173 = vmatpush2.msra.mxu0 0.0
    %174 = vmatprep.subr.mxu0 0.0
    %175 = vmatpush2.msra.mxu0 0.0
    %176 = vmatprep.subr.mxu0 0.0
    %177 = vmatpush2.msra.mxu0 0.0
    %178 = vmatprep.subr.mxu0 0.0
    %179 = vmatpush2.msra.mxu0 0.0
    %180 = vmatprep.mubr.f32.mxu0 0.0
    %181 = vmatmul.mubr.f32.gmra.mxu0 %v89
    %v182 = vpop.f32.mrf.mxu0
    %v183 = vadd.f32 %v71, %v182
    %v184 = vpop.f32.mrf.mxu0
    %v185 = vadd.f32 %v75, %v184
    %186 = vmatprep.mubr.f32.mxu0 0.0
    %187 = vmatmul.mubr.f32.gmra.mxu0 %v92
    %v188 = vpop.f32.mrf.mxu0
    %v189 = vadd.f32 %v71, %v188
    %v190 = vpop.f32.mrf.mxu0
    %v191 = vadd.f32 %v75, %v190
    %192 = vmatprep.mubr.f32.mxu0 0.0
    %193 = vmatmul.mubr.f32.gmra.mxu0 %v95
    %v194 = vpop.f32.mrf.mxu0
    %v195 = vadd.f32 %v71, %v194
    %v196 = vpop.f32.mrf.mxu0
    %v197 = vadd.f32 %v75, %v196
    %198 = vmatprep.mubr.f32.mxu0 0.0
    %199 = vmatmul.mubr.f32.gmra.mxu0 %v98
    %v200 = vpop.f32.mrf.mxu0
    %v201 = vadd.f32 %v71, %v200
    %v202 = vpop.f32.mrf.mxu0
    %v203 = vadd.f32 %v75, %v202
    %204 = vmatprep.mubr.f32.mxu0 0.0
    %205 = vmatmul.mubr.f32.gmra.mxu0 %v101
    %v206 = vpop.f32.mrf.mxu0
    %v207 = vadd.f32 %v71, %v206
    %v208 = vpop.f32.mrf.mxu0
    %v209 = vadd.f32 %v75, %v208
    %210 = vmatprep.mubr.f32.mxu0 0.0
    %211 = vmatmul.mubr.f32.gmra.mxu0 %v104
    %v212 = vpop.f32.mrf.mxu0
    %v213 = vadd.f32 %v71, %v212
    %v214 = vpop.f32.mrf.mxu0
    %v215 = vadd.f32 %v75, %v214
    %216 = vmatprep.mubr.f32.mxu0 0.0
    %217 = vmatmul.mubr.f32.gmra.mxu0 %v107
    %v218 = vpop.f32.mrf.mxu0
    %v219 = vadd.f32 %v71, %v218
    %v220 = vpop.f32.mrf.mxu0
    %v221 = vadd.f32 %v75, %v220
    %222 = vmatprep.mubr.f32.mxu0 0.0
    %223 = vmatmul.mubr.f32.gmra.mxu0 %v110
    %v224 = vpop.f32.mrf.mxu0
    %v225 = vadd.f32 %v71, %v224
    %v226 = vpop.f32.mrf.mxu0
    %v227 = vadd.f32 %v75, %v226
    %228 = vdwg.mxu0
    %v229 = vld [vmem:[#allocation3] sm:$0xff]
    %v230 = vld [vmem:[#allocation3 + $0x8] sm:$0xff]
    %v231 = vld [vmem:[#allocation3 + $0x10] sm:$0xff]
    %v232 = vld [vmem:[#allocation3 + $0x18] sm:$0xff]
    %v233 = vld [vmem:[#allocation3 + $0x20] sm:$0xff]
    %v234 = vld [vmem:[#allocation3 + $0x28] sm:$0xff]
    %v235 = vld [vmem:[#allocation3 + $0x30] sm:$0xff]
    %v236 = vld [vmem:[#allocation3 + $0x38] sm:$0xff]
    %v237 = vld [vmem:[#allocation3 + $0x40] sm:$0xff]
    %v238 = vld [vmem:[#allocation3 + $0x48] sm:$0xff]
    %v239 = vld [vmem:[#allocation3 + $0x50] sm:$0xff]
    %v240 = vld [vmem:[#allocation3 + $0x58] sm:$0xff]
    %v241 = vld [vmem:[#allocation3 + $0x60] sm:$0xff]
    %v242 = vld [vmem:[#allocation3 + $0x68] sm:$0xff]
    %v243 = vld [vmem:[#allocation3 + $0x70] sm:$0xff]
    %v244 = vld [vmem:[#allocation3 + $0x78] sm:$0xff]
    %v245 = vld [vmem:[%s1] sm:$0x3]
    %v246 = vsel %vm56, %v245, 0.0
    %v247 = vld [vmem:[%s2] sm:$0x3]
    %v248 = vsel %vm56, %v247, 0.0
    %vm249 = vcmask 523264
    %v251 = vsel %vm249, %v246, 0
    %253 = vmatprep.subr.mxu0 0.0
    %254 = vmatpush1.msra.mxu0 0.0
    %255 = vmatprep.subr.mxu0 0.0
    %256 = vmatpush1.msra.mxu0 0.0
    %257 = vmatprep.subr.mxu0 0.0
    %258 = vmatpush1.msra.mxu0 0.0
    %259 = vmatprep.subr.mxu0 0.0
    %260 = vmatpush1.msra.mxu0 0.0
    %261 = vmatprep.subr.mxu0 0.0
    %262 = vmatpush1.msra.mxu0 0.0
    %263 = vmatprep.subr.mxu0 0.0
    %264 = vmatpush1.msra.mxu0 0.0
    %265 = vmatprep.subr.mxu0 0.0
    %266 = vmatpush1.msra.mxu0 0.0
    %267 = vmatprep.subr.mxu0 0.0
    %268 = vmatpush1.msra.mxu0 0.0
    %269 = vmatprep.subr.mxu0 %v244
    %270 = vmatpush1.msra.mxu0 %v243
    %271 = vmatprep.subr.mxu0 %v242
    %272 = vmatpush1.msra.mxu0 %v241
    %273 = vmatprep.subr.mxu0 %v240
    %274 = vmatpush1.msra.mxu0 %v239
    %275 = vmatprep.subr.mxu0 %v238
    %276 = vmatpush1.msra.mxu0 %v237
    %277 = vmatprep.subr.mxu0 %v236
    %278 = vmatpush1.msra.mxu0 %v235
    %279 = vmatprep.subr.mxu0 %v234
    %280 = vmatpush1.msra.mxu0 %v233
    %281 = vmatprep.subr.mxu0 %v232
    %282 = vmatpush1.msra.mxu0 %v231
    %283 = vmatprep.subr.mxu0 %v230
    %284 = vmatpush1.msra.mxu0 %v229
    %285 = vmatprep.subr.mxu0 0.0
    %286 = vmatpush2.msra.mxu0 0.0
    %287 = vmatprep.subr.mxu0 0.0
    %288 = vmatpush2.msra.mxu0 0.0
    %289 = vmatprep.subr.mxu0 0.0
    %290 = vmatpush2.msra.mxu0 0.0
    %291 = vmatprep.subr.mxu0 0.0
    %292 = vmatpush2.msra.mxu0 0.0
    %293 = vmatprep.subr.mxu0 0.0
    %294 = vmatpush2.msra.mxu0 0.0
    %295 = vmatprep.subr.mxu0 0.0
    %296 = vmatpush2.msra.mxu0 0.0
    %297 = vmatprep.subr.mxu0 0.0
    %298 = vmatpush2.msra.mxu0 0.0
    %299 = vmatprep.subr.mxu0 0.0
    %300 = vmatpush2.msra.mxu0 0.0
    %301 = vmatprep.subr.mxu0 0.0
    %302 = vmatpush2.msra.mxu0 0.0
    %303 = vmatprep.subr.mxu0 0.0
    %304 = vmatpush2.msra.mxu0 0.0
    %305 = vmatprep.subr.mxu0 0.0
    %306 = vmatpush2.msra.mxu0 0.0
    %307 = vmatprep.subr.mxu0 0.0
    %308 = vmatpush2.msra.mxu0 0.0
    %309 = vmatprep.subr.mxu0 0.0
    %310 = vmatpush2.msra.mxu0 0.0
    %311 = vmatprep.subr.mxu0 0.0
    %312 = vmatpush2.msra.mxu0 0.0
    %313 = vmatprep.subr.mxu0 0.0
    %314 = vmatpush2.msra.mxu0 0.0
    %315 = vmatprep.subr.mxu0 0.0
    %316 = vmatpush2.msra.mxu0 0.0
    %317 = vmatprep.mubr.f32.mxu0 0.0
    %318 = vmatmul.mubr.f32.gmra.mxu0 %v251
    %v319 = vpop.f32.mrf.mxu0
    %v320 = vadd.f32 0.0, %v319
    %v321 = vpop.f32.mrf.mxu0
    %v322 = vadd.f32 0.0, %v321
    %323 = vdwg.mxu0
    %v324 = vadd.f32 %v183, %v320
    %v325 = vadd.f32 %v185, %v322
    %v326 = vtanh.pop %v324
    %v327 = vtanh.pop %v325
    %v328 = vmul.f32 %v326, 0.5
    %v329 = vadd.f32 %v328, 0.5
    %v330 = vmul.f32 %v327, 0.5
    %v331 = vadd.f32 %v330, 0.5
    %333 = vrot.lane.b32.xlu0 %v248, 64
    %v334 = vpop.permute.xlu0 %333
    %v336 = vmul.f32 %v329, %v334
    %v337 = vmul.f32 %v329, %v327
    %339 = vrot.lane.b32.xlu0 %v337, 64
    %v340 = vpop.permute.xlu0 %339
    %v342 = vadd.f32 %v336, %v340
    %v343 = vtanh.pop %v342
    %v344 = vmul.f32 %v331, %v343
    %346 = vrot.lane.b32.xlu0 %v344, 64
    %v347 = vpop.permute.xlu0 %346
    %349 = vst.msk [vmem:[#allocation2] sm:$0xff] %vm249, %v347
    %v350 = vsel %vm249, %v347, 0
    %352 = vmatprep.subr.mxu0 0.0
    %353 = vmatpush1.msra.mxu0 0.0
    %354 = vmatprep.subr.mxu0 0.0
    %355 = vmatpush1.msra.mxu0 0.0
    %356 = vmatprep.subr.mxu0 0.0
    %357 = vmatpush1.msra.mxu0 0.0
    %358 = vmatprep.subr.mxu0 0.0
    %359 = vmatpush1.msra.mxu0 0.0
    %360 = vmatprep.subr.mxu0 0.0
    %361 = vmatpush1.msra.mxu0 0.0
    %362 = vmatprep.subr.mxu0 0.0
    %363 = vmatpush1.msra.mxu0 0.0
    %364 = vmatprep.subr.mxu0 0.0
    %365 = vmatpush1.msra.mxu0 0.0
    %366 = vmatprep.subr.mxu0 0.0
    %367 = vmatpush1.msra.mxu0 0.0
    %368 = vmatprep.subr.mxu0 %v244
    %369 = vmatpush1.msra.mxu0 %v243
    %370 = vmatprep.subr.mxu0 %v242
    %371 = vmatpush1.msra.mxu0 %v241
    %372 = vmatprep.subr.mxu0 %v240
    %373 = vmatpush1.msra.mxu0 %v239
    %374 = vmatprep.subr.mxu0 %v238
    %375 = vmatpush1.msra.mxu0 %v237
    %376 = vmatprep.subr.mxu0 %v236
    %377 = vmatpush1.msra.mxu0 %v235
    %378 = vmatprep.subr.mxu0 %v234
    %379 = vmatpush1.msra.mxu0 %v233
    %380 = vmatprep.subr.mxu0 %v232
    %381 = vmatpush1.msra.mxu0 %v231
    %382 = vmatprep.subr.mxu0 %v230
    %383 = vmatpush1.msra.mxu0 %v229
    %384 = vmatprep.subr.mxu0 0.0
    %385 = vmatpush2.msra.mxu0 0.0
    %386 = vmatprep.subr.mxu0 0.0
    %387 = vmatpush2.msra.mxu0 0.0
    %388 = vmatprep.subr.mxu0 0.0
    %389 = vmatpush2.msra.mxu0 0.0
    %390 = vmatprep.subr.mxu0 0.0
    %391 = vmatpush2.msra.mxu0 0.0
    %392 = vmatprep.subr.mxu0 0.0
    %393 = vmatpush2.msra.mxu0 0.0
    %394 = vmatprep.subr.mxu0 0.0
    %395 = vmatpush2.msra.mxu0 0.0
    %396 = vmatprep.subr.mxu0 0.0
    %397 = vmatpush2.msra.mxu0 0.0
    %398 = vmatprep.subr.mxu0 0.0
    %399 = vmatpush2.msra.mxu0 0.0
    %400 = vmatprep.subr.mxu0 0.0
    %401 = vmatpush2.msra.mxu0 0.0
    %402 = vmatprep.subr.mxu0 0.0
    %403 = vmatpush2.msra.mxu0 0.0
    %404 = vmatprep.subr.mxu0 0.0
    %405 = vmatpush2.msra.mxu0 0.0
    %406 = vmatprep.subr.mxu0 0.0
    %407 = vmatpush2.msra.mxu0 0.0
    %408 = vmatprep.subr.mxu0 0.0
    %409 = vmatpush2.msra.mxu0 0.0
    %410 = vmatprep.subr.mxu0 0.0
    %411 = vmatpush2.msra.mxu0 0.0
    %412 = vmatprep.subr.mxu0 0.0
    %413 = vmatpush2.msra.mxu0 0.0
    %414 = vmatprep.subr.mxu0 0.0
    %415 = vmatpush2.msra.mxu0 0.0
    %416 = vmatprep.mubr.f32.mxu0 0.0
    %417 = vmatmul.mubr.f32.gmra.mxu0 %v350
    %v418 = vpop.f32.mrf.mxu0
    %v419 = vadd.f32 0.0, %v418
    %v420 = vpop.f32.mrf.mxu0
    %v421 = vadd.f32 0.0, %v420
    %422 = vdwg.mxu0
    %v423 = vadd.f32 %v189, %v419
    %v424 = vadd.f32 %v191, %v421
    %v425 = vtanh.pop %v423
    %v426 = vtanh.pop %v424
    %v427 = vmul.f32 %v425, 0.5
    %v428 = vadd.f32 %v427, 0.5
    %v429 = vmul.f32 %v426, 0.5
    %v430 = vadd.f32 %v429, 0.5
    %v431 = vmul.f32 %v428, %v342
    %v432 = vmul.f32 %v428, %v426
    %434 = vrot.lane.b32.xlu0 %v432, 64
    %v435 = vpop.permute.xlu0 %434
    %v437 = vadd.f32 %v431, %v435
    %v438 = vtanh.pop %v437
    %v439 = vmul.f32 %v430, %v438
    %441 = vrot.lane.b32.xlu0 %v439, 64
    %v442 = vpop.permute.xlu0 %441
    %444 = vst.msk [vmem:[#allocation2 + $0x8] sm:$0xff] %vm249, %v442
    %v445 = vsel %vm249, %v442, 0
    %447 = vmatprep.subr.mxu0 0.0
    %448 = vmatpush1.msra.mxu0 0.0
    %449 = vmatprep.subr.mxu0 0.0
    %450 = vmatpush1.msra.mxu0 0.0
    %451 = vmatprep.subr.mxu0 0.0
    %452 = vmatpush1.msra.mxu0 0.0
    %453 = vmatprep.subr.mxu0 0.0
    %454 = vmatpush1.msra.mxu0 0.0
    %455 = vmatprep.subr.mxu0 0.0
    %456 = vmatpush1.msra.mxu0 0.0
    %457 = vmatprep.subr.mxu0 0.0
    %458 = vmatpush1.msra.mxu0 0.0
    %459 = vmatprep.subr.mxu0 0.0
    %460 = vmatpush1.msra.mxu0 0.0
    %461 = vmatprep.subr.mxu0 0.0
    %462 = vmatpush1.msra.mxu0 0.0
    %463 = vmatprep.subr.mxu0 %v244
    %464 = vmatpush1.msra.mxu0 %v243
    %465 = vmatprep.subr.mxu0 %v242
    %466 = vmatpush1.msra.mxu0 %v241
    %467 = vmatprep.subr.mxu0 %v240
    %468 = vmatpush1.msra.mxu0 %v239
    %469 = vmatprep.subr.mxu0 %v238
    %470 = vmatpush1.msra.mxu0 %v237
    %471 = vmatprep.subr.mxu0 %v236
    %472 = vmatpush1.msra.mxu0 %v235
    %473 = vmatprep.subr.mxu0 %v234
    %474 = vmatpush1.msra.mxu0 %v233
    %475 = vmatprep.subr.mxu0 %v232
    %476 = vmatpush1.msra.mxu0 %v231
    %477 = vmatprep.subr.mxu0 %v230
    %478 = vmatpush1.msra.mxu0 %v229
    %479 = vmatprep.subr.mxu0 0.0
    %480 = vmatpush2.msra.mxu0 0.0
    %481 = vmatprep.subr.mxu0 0.0
    %482 = vmatpush2.msra.mxu0 0.0
    %483 = vmatprep.subr.mxu0 0.0
    %484 = vmatpush2.msra.mxu0 0.0
    %485 = vmatprep.subr.mxu0 0.0
    %486 = vmatpush2.msra.mxu0 0.0
    %487 = vmatprep.subr.mxu0 0.0
    %488 = vmatpush2.msra.mxu0 0.0
    %489 = vmatprep.subr.mxu0 0.0
    %490 = vmatpush2.msra.mxu0 0.0
    %491 = vmatprep.subr.mxu0 0.0
    %492 = vmatpush2.msra.mxu0 0.0
    %493 = vmatprep.subr.mxu0 0.0
    %494 = vmatpush2.msra.mxu0 0.0
    %495 = vmatprep.subr.mxu0 0.0
    %496 = vmatpush2.msra.mxu0 0.0
    %497 = vmatprep.subr.mxu0 0.0
    %498 = vmatpush2.msra.mxu0 0.0
    %499 = vmatprep.subr.mxu0 0.0
    %500 = vmatpush2.msra.mxu0 0.0
    %501 = vmatprep.subr.mxu0 0.0
    %502 = vmatpush2.msra.mxu0 0.0
    %503 = vmatprep.subr.mxu0 0.0
    %504 = vmatpush2.msra.mxu0 0.0
    %505 = vmatprep.subr.mxu0 0.0
    %506 = vmatpush2.msra.mxu0 0.0
    %507 = vmatprep.subr.mxu0 0.0
    %508 = vmatpush2.msra.mxu0 0.0
    %509 = vmatprep.subr.mxu0 0.0
    %510 = vmatpush2.msra.mxu0 0.0
    %511 = vmatprep.mubr.f32.mxu0 0.0
    %512 = vmatmul.mubr.f32.gmra.mxu0 %v445
    %v513 = vpop.f32.mrf.mxu0
    %v514 = vadd.f32 0.0, %v513
    %v515 = vpop.f32.mrf.mxu0
    %v516 = vadd.f32 0.0, %v515
    %517 = vdwg.mxu0
    %v518 = vadd.f32 %v195, %v514
    %v519 = vadd.f32 %v197, %v516
    %v520 = vtanh.pop %v518
    %v521 = vtanh.pop %v519
    %v522 = vmul.f32 %v520, 0.5
    %v523 = vadd.f32 %v522, 0.5
    %v524 = vmul.f32 %v521, 0.5
    %v525 = vadd.f32 %v524, 0.5
    %v526 = vmul.f32 %v523, %v437
    %v527 = vmul.f32 %v523, %v521
    %529 = vrot.lane.b32.xlu0 %v527, 64
    %v530 = vpop.permute.xlu0 %529
    %v532 = vadd.f32 %v526, %v530
    %v533 = vtanh.pop %v532
    %v534 = vmul.f32 %v525, %v533
    %536 = vrot.lane.b32.xlu0 %v534, 64
    %v537 = vpop.permute.xlu0 %536
    %539 = vst.msk [vmem:[#allocation2 + $0x10] sm:$0xff] %vm249, %v537
    %v540 = vsel %vm249, %v537, 0
    %542 = vmatprep.subr.mxu0 0.0
    %543 = vmatpush1.msra.mxu0 0.0
    %544 = vmatprep.subr.mxu0 0.0
    %545 = vmatpush1.msra.mxu0 0.0
    %546 = vmatprep.subr.mxu0 0.0
    %547 = vmatpush1.msra.mxu0 0.0
    %548 = vmatprep.subr.mxu0 0.0
    %549 = vmatpush1.msra.mxu0 0.0
    %550 = vmatprep.subr.mxu0 0.0
    %551 = vmatpush1.msra.mxu0 0.0
    %552 = vmatprep.subr.mxu0 0.0
    %553 = vmatpush1.msra.mxu0 0.0
    %554 = vmatprep.subr.mxu0 0.0
    %555 = vmatpush1.msra.mxu0 0.0
    %556 = vmatprep.subr.mxu0 0.0
    %557 = vmatpush1.msra.mxu0 0.0
    %558 = vmatprep.subr.mxu0 %v244
    %559 = vmatpush1.msra.mxu0 %v243
    %560 = vmatprep.subr.mxu0 %v242
    %561 = vmatpush1.msra.mxu0 %v241
    %562 = vmatprep.subr.mxu0 %v240
    %563 = vmatpush1.msra.mxu0 %v239
    %564 = vmatprep.subr.mxu0 %v238
    %565 = vmatpush1.msra.mxu0 %v237
    %566 = vmatprep.subr.mxu0 %v236
    %567 = vmatpush1.msra.mxu0 %v235
    %568 = vmatprep.subr.mxu0 %v234
    %569 = vmatpush1.msra.mxu0 %v233
    %570 = vmatprep.subr.mxu0 %v232
    %571 = vmatpush1.msra.mxu0 %v231
    %572 = vmatprep.subr.mxu0 %v230
    %573 = vmatpush1.msra.mxu0 %v229
    %574 = vmatprep.subr.mxu0 0.0
    %575 = vmatpush2.msra.mxu0 0.0
    %576 = vmatprep.subr.mxu0 0.0
    %577 = vmatpush2.msra.mxu0 0.0
    %578 = vmatprep.subr.mxu0 0.0
    %579 = vmatpush2.msra.mxu0 0.0
    %580 = vmatprep.subr.mxu0 0.0
    %581 = vmatpush2.msra.mxu0 0.0
    %582 = vmatprep.subr.mxu0 0.0
    %583 = vmatpush2.msra.mxu0 0.0
    %584 = vmatprep.subr.mxu0 0.0
    %585 = vmatpush2.msra.mxu0 0.0
    %586 = vmatprep.subr.mxu0 0.0
    %587 = vmatpush2.msra.mxu0 0.0
    %588 = vmatprep.subr.mxu0 0.0
    %589 = vmatpush2.msra.mxu0 0.0
    %590 = vmatprep.subr.mxu0 0.0
    %591 = vmatpush2.msra.mxu0 0.0
    %592 = vmatprep.subr.mxu0 0.0
    %593 = vmatpush2.msra.mxu0 0.0
    %594 = vmatprep.subr.mxu0 0.0
    %595 = vmatpush2.msra.mxu0 0.0
    %596 = vmatprep.subr.mxu0 0.0
    %597 = vmatpush2.msra.mxu0 0.0
    %598 = vmatprep.subr.mxu0 0.0
    %599 = vmatpush2.msra.mxu0 0.0
    %600 = vmatprep.subr.mxu0 0.0
    %601 = vmatpush2.msra.mxu0 0.0
    %602 = vmatprep.subr.mxu0 0.0
    %603 = vmatpush2.msra.mxu0 0.0
    %604 = vmatprep.subr.mxu0 0.0
    %605 = vmatpush2.msra.mxu0 0.0
    %606 = vmatprep.mubr.f32.mxu0 0.0
    %607 = vmatmul.mubr.f32.gmra.mxu0 %v540
    %v608 = vpop.f32.mrf.mxu0
    %v609 = vadd.f32 0.0, %v608
    %v610 = vpop.f32.mrf.mxu0
    %v611 = vadd.f32 0.0, %v610
    %612 = vdwg.mxu0
    %v613 = vadd.f32 %v201, %v609
    %v614 = vadd.f32 %v203, %v611
    %v615 = vtanh.pop %v613
    %v616 = vtanh.pop %v614
    %v617 = vmul.f32 %v615, 0.5
    %v618 = vadd.f32 %v617, 0.5
    %v619 = vmul.f32 %v616, 0.5
    %v620 = vadd.f32 %v619, 0.5
    %v621 = vmul.f32 %v618, %v532
    %v622 = vmul.f32 %v618, %v616
    %624 = vrot.lane.b32.xlu0 %v622, 64
    %v625 = vpop.permute.xlu0 %624
    %v627 = vadd.f32 %v621, %v625
    %v628 = vtanh.pop %v627
    %v629 = vmul.f32 %v620, %v628
    %631 = vrot.lane.b32.xlu0 %v629, 64
    %v632 = vpop.permute.xlu0 %631
    %634 = vst.msk [vmem:[#allocation2 + $0x18] sm:$0xff] %vm249, %v632
    %v635 = vsel %vm249, %v632, 0
    %637 = vmatprep.subr.mxu0 0.0
    %638 = vmatpush1.msra.mxu0 0.0
    %639 = vmatprep.subr.mxu0 0.0
    %640 = vmatpush1.msra.mxu0 0.0
    %641 = vmatprep.subr.mxu0 0.0
    %642 = vmatpush1.msra.mxu0 0.0
    %643 = vmatprep.subr.mxu0 0.0
    %644 = vmatpush1.msra.mxu0 0.0
    %645 = vmatprep.subr.mxu0 0.0
    %646 = vmatpush1.msra.mxu0 0.0
    %647 = vmatprep.subr.mxu0 0.0
    %648 = vmatpush1.msra.mxu0 0.0
    %649 = vmatprep.subr.mxu0 0.0
    %650 = vmatpush1.msra.mxu0 0.0
    %651 = vmatprep.subr.mxu0 0.0
    %652 = vmatpush1.msra.mxu0 0.0
    %653 = vmatprep.subr.mxu0 %v244
    %654 = vmatpush1.msra.mxu0 %v243
    %655 = vmatprep.subr.mxu0 %v242
    %656 = vmatpush1.msra.mxu0 %v241
    %657 = vmatprep.subr.mxu0 %v240
    %658 = vmatpush1.msra.mxu0 %v239
    %659 = vmatprep.subr.mxu0 %v238
    %660 = vmatpush1.msra.mxu0 %v237
    %661 = vmatprep.subr.mxu0 %v236
    %662 = vmatpush1.msra.mxu0 %v235
    %663 = vmatprep.subr.mxu0 %v234
    %664 = vmatpush1.msra.mxu0 %v233
    %665 = vmatprep.subr.mxu0 %v232
    %666 = vmatpush1.msra.mxu0 %v231
    %667 = vmatprep.subr.mxu0 %v230
    %668 = vmatpush1.msra.mxu0 %v229
    %669 = vmatprep.subr.mxu0 0.0
    %670 = vmatpush2.msra.mxu0 0.0
    %671 = vmatprep.subr.mxu0 0.0
    %672 = vmatpush2.msra.mxu0 0.0
    %673 = vmatprep.subr.mxu0 0.0
    %674 = vmatpush2.msra.mxu0 0.0
    %675 = vmatprep.subr.mxu0 0.0
    %676 = vmatpush2.msra.mxu0 0.0
    %677 = vmatprep.subr.mxu0 0.0
    %678 = vmatpush2.msra.mxu0 0.0
    %679 = vmatprep.subr.mxu0 0.0
    %680 = vmatpush2.msra.mxu0 0.0
    %681 = vmatprep.subr.mxu0 0.0
    %682 = vmatpush2.msra.mxu0 0.0
    %683 = vmatprep.subr.mxu0 0.0
    %684 = vmatpush2.msra.mxu0 0.0
    %685 = vmatprep.subr.mxu0 0.0
    %686 = vmatpush2.msra.mxu0 0.0
    %687 = vmatprep.subr.mxu0 0.0
    %688 = vmatpush2.msra.mxu0 0.0
    %689 = vmatprep.subr.mxu0 0.0
    %690 = vmatpush2.msra.mxu0 0.0
    %691 = vmatprep.subr.mxu0 0.0
    %692 = vmatpush2.msra.mxu0 0.0
    %693 = vmatprep.subr.mxu0 0.0
    %694 = vmatpush2.msra.mxu0 0.0
    %695 = vmatprep.subr.mxu0 0.0
    %696 = vmatpush2.msra.mxu0 0.0
    %697 = vmatprep.subr.mxu0 0.0
    %698 = vmatpush2.msra.mxu0 0.0
    %699 = vmatprep.subr.mxu0 0.0
    %700 = vmatpush2.msra.mxu0 0.0
    %701 = vmatprep.mubr.f32.mxu0 0.0
    %702 = vmatmul.mubr.f32.gmra.mxu0 %v635
    %v703 = vpop.f32.mrf.mxu0
    %v704 = vadd.f32 0.0, %v703
    %v705 = vpop.f32.mrf.mxu0
    %v706 = vadd.f32 0.0, %v705
    %707 = vdwg.mxu0
    %v708 = vadd.f32 %v207, %v704
    %v709 = vadd.f32 %v209, %v706
    %v710 = vtanh.pop %v708
    %v711 = vtanh.pop %v709
    %v712 = vmul.f32 %v710, 0.5
    %v713 = vadd.f32 %v712, 0.5
    %v714 = vmul.f32 %v711, 0.5
    %v715 = vadd.f32 %v714, 0.5
    %v716 = vmul.f32 %v713, %v627
    %v717 = vmul.f32 %v713, %v711
    %719 = vrot.lane.b32.xlu0 %v717, 64
    %v720 = vpop.permute.xlu0 %719
    %v722 = vadd.f32 %v716, %v720
    %v723 = vtanh.pop %v722
    %v724 = vmul.f32 %v715, %v723
    %726 = vrot.lane.b32.xlu0 %v724, 64
    %v727 = vpop.permute.xlu0 %726
    %729 = vst.msk [vmem:[#allocation2 + $0x20] sm:$0xff] %vm249, %v727
    %v730 = vsel %vm249, %v727, 0
    %732 = vmatprep.subr.mxu0 0.0
    %733 = vmatpush1.msra.mxu0 0.0
    %734 = vmatprep.subr.mxu0 0.0
    %735 = vmatpush1.msra.mxu0 0.0
    %736 = vmatprep.subr.mxu0 0.0
    %737 = vmatpush1.msra.mxu0 0.0
    %738 = vmatprep.subr.mxu0 0.0
    %739 = vmatpush1.msra.mxu0 0.0
    %740 = vmatprep.subr.mxu0 0.0
    %741 = vmatpush1.msra.mxu0 0.0
    %742 = vmatprep.subr.mxu0 0.0
    %743 = vmatpush1.msra.mxu0 0.0
    %744 = vmatprep.subr.mxu0 0.0
    %745 = vmatpush1.msra.mxu0 0.0
    %746 = vmatprep.subr.mxu0 0.0
    %747 = vmatpush1.msra.mxu0 0.0
    %748 = vmatprep.subr.mxu0 %v244
    %749 = vmatpush1.msra.mxu0 %v243
    %750 = vmatprep.subr.mxu0 %v242
    %751 = vmatpush1.msra.mxu0 %v241
    %752 = vmatprep.subr.mxu0 %v240
    %753 = vmatpush1.msra.mxu0 %v239
    %754 = vmatprep.subr.mxu0 %v238
    %755 = vmatpush1.msra.mxu0 %v237
    %756 = vmatprep.subr.mxu0 %v236
    %757 = vmatpush1.msra.mxu0 %v235
    %758 = vmatprep.subr.mxu0 %v234
    %759 = vmatpush1.msra.mxu0 %v233
    %760 = vmatprep.subr.mxu0 %v232
    %761 = vmatpush1.msra.mxu0 %v231
    %762 = vmatprep.subr.mxu0 %v230
    %763 = vmatpush1.msra.mxu0 %v229
    %764 = vmatprep.subr.mxu0 0.0
    %765 = vmatpush2.msra.mxu0 0.0
    %766 = vmatprep.subr.mxu0 0.0
    %767 = vmatpush2.msra.mxu0 0.0
    %768 = vmatprep.subr.mxu0 0.0
    %769 = vmatpush2.msra.mxu0 0.0
    %770 = vmatprep.subr.mxu0 0.0
    %771 = vmatpush2.msra.mxu0 0.0
    %772 = vmatprep.subr.mxu0 0.0
    %773 = vmatpush2.msra.mxu0 0.0
    %774 = vmatprep.subr.mxu0 0.0
    %775 = vmatpush2.msra.mxu0 0.0
    %776 = vmatprep.subr.mxu0 0.0
    %777 = vmatpush2.msra.mxu0 0.0
    %778 = vmatprep.subr.mxu0 0.0
    %779 = vmatpush2.msra.mxu0 0.0
    %780 = vmatprep.subr.mxu0 0.0
    %781 = vmatpush2.msra.mxu0 0.0
    %782 = vmatprep.subr.mxu0 0.0
    %783 = vmatpush2.msra.mxu0 0.0
    %784 = vmatprep.subr.mxu0 0.0
    %785 = vmatpush2.msra.mxu0 0.0
    %786 = vmatprep.subr.mxu0 0.0
    %787 = vmatpush2.msra.mxu0 0.0
    %788 = vmatprep.subr.mxu0 0.0
    %789 = vmatpush2.msra.mxu0 0.0
    %790 = vmatprep.subr.mxu0 0.0
    %791 = vmatpush2.msra.mxu0 0.0
    %792 = vmatprep.subr.mxu0 0.0
    %793 = vmatpush2.msra.mxu0 0.0
    %794 = vmatprep.subr.mxu0 0.0
    %795 = vmatpush2.msra.mxu0 0.0
    %796 = vmatprep.mubr.f32.mxu0 0.0
    %797 = vmatmul.mubr.f32.gmra.mxu0 %v730
    %v798 = vpop.f32.mrf.mxu0
    %v799 = vadd.f32 0.0, %v798
    %v800 = vpop.f32.mrf.mxu0
    %v801 = vadd.f32 0.0, %v800
    %802 = vdwg.mxu0
    %v803 = vadd.f32 %v213, %v799
    %v804 = vadd.f32 %v215, %v801
    %v805 = vtanh.pop %v803
    %v806 = vtanh.pop %v804
    %v807 = vmul.f32 %v805, 0.5
    %v808 = vadd.f32 %v807, 0.5
    %v809 = vmul.f32 %v806, 0.5
    %v810 = vadd.f32 %v809, 0.5
    %v811 = vmul.f32 %v808, %v722
    %v812 = vmul.f32 %v808, %v806
    %814 = vrot.lane.b32.xlu0 %v812, 64
    %v815 = vpop.permute.xlu0 %814
    %v817 = vadd.f32 %v811, %v815
    %v818 = vtanh.pop %v817
    %v819 = vmul.f32 %v810, %v818
    %821 = vrot.lane.b32.xlu0 %v819, 64
    %v822 = vpop.permute.xlu0 %821
    %824 = vst.msk [vmem:[#allocation2 + $0x28] sm:$0xff] %vm249, %v822
    %v825 = vsel %vm249, %v822, 0
    %827 = vmatprep.subr.mxu0 0.0
    %828 = vmatpush1.msra.mxu0 0.0
    %829 = vmatprep.subr.mxu0 0.0
    %830 = vmatpush1.msra.mxu0 0.0
    %831 = vmatprep.subr.mxu0 0.0
    %832 = vmatpush1.msra.mxu0 0.0
    %833 = vmatprep.subr.mxu0 0.0
    %834 = vmatpush1.msra.mxu0 0.0
    %835 = vmatprep.subr.mxu0 0.0
    %836 = vmatpush1.msra.mxu0 0.0
    %837 = vmatprep.subr.mxu0 0.0
    %838 = vmatpush1.msra.mxu0 0.0
    %839 = vmatprep.subr.mxu0 0.0
    %840 = vmatpush1.msra.mxu0 0.0
    %841 = vmatprep.subr.mxu0 0.0
    %842 = vmatpush1.msra.mxu0 0.0
    %843 = vmatprep.subr.mxu0 %v244
    %844 = vmatpush1.msra.mxu0 %v243
    %845 = vmatprep.subr.mxu0 %v242
    %846 = vmatpush1.msra.mxu0 %v241
    %847 = vmatprep.subr.mxu0 %v240
    %848 = vmatpush1.msra.mxu0 %v239
    %849 = vmatprep.subr.mxu0 %v238
    %850 = vmatpush1.msra.mxu0 %v237
    %851 = vmatprep.subr.mxu0 %v236
    %852 = vmatpush1.msra.mxu0 %v235
    %853 = vmatprep.subr.mxu0 %v234
    %854 = vmatpush1.msra.mxu0 %v233
    %855 = vmatprep.subr.mxu0 %v232
    %856 = vmatpush1.msra.mxu0 %v231
    %857 = vmatprep.subr.mxu0 %v230
    %858 = vmatpush1.msra.mxu0 %v229
    %859 = vmatprep.subr.mxu0 0.0
    %860 = vmatpush2.msra.mxu0 0.0
    %861 = vmatprep.subr.mxu0 0.0
    %862 = vmatpush2.msra.mxu0 0.0
    %863 = vmatprep.subr.mxu0 0.0
    %864 = vmatpush2.msra.mxu0 0.0
    %865 = vmatprep.subr.mxu0 0.0
    %866 = vmatpush2.msra.mxu0 0.0
    %867 = vmatprep.subr.mxu0 0.0
    %868 = vmatpush2.msra.mxu0 0.0
    %869 = vmatprep.subr.mxu0 0.0
    %870 = vmatpush2.msra.mxu0 0.0
    %871 = vmatprep.subr.mxu0 0.0
    %872 = vmatpush2.msra.mxu0 0.0
    %873 = vmatprep.subr.mxu0 0.0
    %874 = vmatpush2.msra.mxu0 0.0
    %875 = vmatprep.subr.mxu0 0.0
    %876 = vmatpush2.msra.mxu0 0.0
    %877 = vmatprep.subr.mxu0 0.0
    %878 = vmatpush2.msra.mxu0 0.0
    %879 = vmatprep.subr.mxu0 0.0
    %880 = vmatpush2.msra.mxu0 0.0
    %881 = vmatprep.subr.mxu0 0.0
    %882 = vmatpush2.msra.mxu0 0.0
    %883 = vmatprep.subr.mxu0 0.0
    %884 = vmatpush2.msra.mxu0 0.0
    %885 = vmatprep.subr.mxu0 0.0
    %886 = vmatpush2.msra.mxu0 0.0
    %887 = vmatprep.subr.mxu0 0.0
    %888 = vmatpush2.msra.mxu0 0.0
    %889 = vmatprep.subr.mxu0 0.0
    %890 = vmatpush2.msra.mxu0 0.0
    %891 = vmatprep.mubr.f32.mxu0 0.0
    %892 = vmatmul.mubr.f32.gmra.mxu0 %v825
    %v893 = vpop.f32.mrf.mxu0
    %v894 = vadd.f32 0.0, %v893
    %v895 = vpop.f32.mrf.mxu0
    %v896 = vadd.f32 0.0, %v895
    %897 = vdwg.mxu0
    %v898 = vadd.f32 %v219, %v894
    %v899 = vadd.f32 %v221, %v896
    %v900 = vtanh.pop %v898
    %v901 = vtanh.pop %v899
    %v902 = vmul.f32 %v900, 0.5
    %v903 = vadd.f32 %v902, 0.5
    %v904 = vmul.f32 %v901, 0.5
    %v905 = vadd.f32 %v904, 0.5
    %v906 = vmul.f32 %v903, %v817
    %v907 = vmul.f32 %v903, %v901
    %909 = vrot.lane.b32.xlu0 %v907, 64
    %v910 = vpop.permute.xlu0 %909
    %v912 = vadd.f32 %v906, %v910
    %v913 = vtanh.pop %v912
    %v914 = vmul.f32 %v905, %v913
    %916 = vrot.lane.b32.xlu0 %v914, 64
    %v917 = vpop.permute.xlu0 %916
    %919 = vst.msk [vmem:[#allocation2 + $0x30] sm:$0xff] %vm249, %v917
    %v920 = vsel %vm249, %v917, 0
    %922 = vmatprep.subr.mxu0 0.0
    %923 = vmatpush1.msra.mxu0 0.0
    %924 = vmatprep.subr.mxu0 0.0
    %925 = vmatpush1.msra.mxu0 0.0
    %926 = vmatprep.subr.mxu0 0.0
    %927 = vmatpush1.msra.mxu0 0.0
    %928 = vmatprep.subr.mxu0 0.0
    %929 = vmatpush1.msra.mxu0 0.0
    %930 = vmatprep.subr.mxu0 0.0
    %931 = vmatpush1.msra.mxu0 0.0
    %932 = vmatprep.subr.mxu0 0.0
    %933 = vmatpush1.msra.mxu0 0.0
    %934 = vmatprep.subr.mxu0 0.0
    %935 = vmatpush1.msra.mxu0 0.0
    %936 = vmatprep.subr.mxu0 0.0
    %937 = vmatpush1.msra.mxu0 0.0
    %938 = vmatprep.subr.mxu0 %v244
    %939 = vmatpush1.msra.mxu0 %v243
    %940 = vmatprep.subr.mxu0 %v242
    %941 = vmatpush1.msra.mxu0 %v241
    %942 = vmatprep.subr.mxu0 %v240
    %943 = vmatpush1.msra.mxu0 %v239
    %944 = vmatprep.subr.mxu0 %v238
    %945 = vmatpush1.msra.mxu0 %v237
    %946 = vmatprep.subr.mxu0 %v236
    %947 = vmatpush1.msra.mxu0 %v235
    %948 = vmatprep.subr.mxu0 %v234
    %949 = vmatpush1.msra.mxu0 %v233
    %950 = vmatprep.subr.mxu0 %v232
    %951 = vmatpush1.msra.mxu0 %v231
    %952 = vmatprep.subr.mxu0 %v230
    %953 = vmatpush1.msra.mxu0 %v229
    %954 = vmatprep.subr.mxu0 0.0
    %955 = vmatpush2.msra.mxu0 0.0
    %956 = vmatprep.subr.mxu0 0.0
    %957 = vmatpush2.msra.mxu0 0.0
    %958 = vmatprep.subr.mxu0 0.0
    %959 = vmatpush2.msra.mxu0 0.0
    %960 = vmatprep.subr.mxu0 0.0
    %961 = vmatpush2.msra.mxu0 0.0
    %962 = vmatprep.subr.mxu0 0.0
    %963 = vmatpush2.msra.mxu0 0.0
    %964 = vmatprep.subr.mxu0 0.0
    %965 = vmatpush2.msra.mxu0 0.0
    %966 = vmatprep.subr.mxu0 0.0
    %967 = vmatpush2.msra.mxu0 0.0
    %968 = vmatprep.subr.mxu0 0.0
    %969 = vmatpush2.msra.mxu0 0.0
    %970 = vmatprep.subr.mxu0 0.0
    %971 = vmatpush2.msra.mxu0 0.0
    %972 = vmatprep.subr.mxu0 0.0
    %973 = vmatpush2.msra.mxu0 0.0
    %974 = vmatprep.subr.mxu0 0.0
    %975 = vmatpush2.msra.mxu0 0.0
    %976 = vmatprep.subr.mxu0 0.0
    %977 = vmatpush2.msra.mxu0 0.0
    %978 = vmatprep.subr.mxu0 0.0
    %979 = vmatpush2.msra.mxu0 0.0
    %980 = vmatprep.subr.mxu0 0.0
    %981 = vmatpush2.msra.mxu0 0.0
    %982 = vmatprep.subr.mxu0 0.0
    %983 = vmatpush2.msra.mxu0 0.0
    %984 = vmatprep.subr.mxu0 0.0
    %985 = vmatpush2.msra.mxu0 0.0
    %986 = vmatprep.mubr.f32.mxu0 0.0
    %987 = vmatmul.mubr.f32.gmra.mxu0 %v920
    %v988 = vpop.f32.mrf.mxu0
    %v989 = vadd.f32 0.0, %v988
    %v990 = vpop.f32.mrf.mxu0
    %v991 = vadd.f32 0.0, %v990
    %992 = vdwg.mxu0
    %v993 = vadd.f32 %v225, %v989
    %v994 = vadd.f32 %v227, %v991
    %v995 = vtanh.pop %v993
    %v996 = vtanh.pop %v994
    %v997 = vmul.f32 %v995, 0.5
    %v998 = vadd.f32 %v997, 0.5
    %v999 = vmul.f32 %v996, 0.5
    %v1000 = vadd.f32 %v999, 0.5
    %v1001 = vmul.f32 %v998, %v912
    %v1002 = vmul.f32 %v998, %v996
    %1004 = vrot.lane.b32.xlu0 %v1002, 64
    %v1005 = vpop.permute.xlu0 %1004
    %v1007 = vadd.f32 %v1001, %v1005
    %v1008 = vtanh.pop %v1007
    %v1009 = vmul.f32 %v1000, %v1008
    %1011 = vrot.lane.b32.xlu0 %v1009, 64
    %v1012 = vpop.permute.xlu0 %1011
    %1014 = vst.msk [vmem:[#allocation2 + $0x38] sm:$0xff] %vm249, %v1012
    %vm1015 = vcmask 517120
    %1016 = vst.msk [vmem:[#allocation6] sm:$0x3] %vm1015, %v1012
    %1018 = vrot.lane.b32.xlu0 %v1007, 64
    %v1019 = vpop.permute.xlu0 %1018
    %1021 = vst.msk [vmem:[#allocation7] sm:$0x3] %vm1015, %v1019
    %v1022 = vld [vmem:[#allocation2] sm:$0xff]
    %v1023 = vld [vmem:[#allocation2 + $0x8] sm:$0xff]
    %v1024 = vld [vmem:[#allocation2 + $0x10] sm:$0xff]
    %v1025 = vld [vmem:[#allocation2 + $0x18] sm:$0xff]
    %v1026 = vld [vmem:[#allocation2 + $0x20] sm:$0xff]
    %v1027 = vld [vmem:[#allocation2 + $0x28] sm:$0xff]
    %v1028 = vld [vmem:[#allocation2 + $0x30] sm:$0xff]
    %v1029 = vld [vmem:[#allocation2 + $0x38] sm:$0xff]
    %v1030 = vld [vmem:[%s6] sm:$0xff]
    %v1031 = vld [vmem:[%s6 + $0x8] sm:$0xff]
    %v1032 = vld [vmem:[%s6 + $0x10] sm:$0xff]
    %v1033 = vld [vmem:[%s6 + $0x18] sm:$0xff]
    %v1034 = vld [vmem:[%s6 + $0x20] sm:$0xff]
    %v1035 = vld [vmem:[%s6 + $0x28] sm:$0xff]
    %v1036 = vld [vmem:[%s6 + $0x30] sm:$0xff]
    %v1037 = vld [vmem:[%s6 + $0x38] sm:$0xff]
    %v1038 = vld [vmem:[%s7] sm:$0x1]
    %v1040 = vlaneseq
    %v1041 = vshrl.u32 %v1040, 7
    %v1042 = vsub.s32 0, %v1041
    %v1043 = vrot.slane %v1038, %v1042
    %v1046 = vsel %vm249, %v1022, 0
    %v1049 = vsel %vm249, %v1023, 0
    %v1052 = vsel %vm249, %v1024, 0
    %v1055 = vsel %vm249, %v1025, 0
    %v1058 = vsel %vm249, %v1026, 0
    %v1061 = vsel %vm249, %v1027, 0
    %v1064 = vsel %vm249, %v1028, 0
    %v1067 = vsel %vm249, %v1029, 0
    %1069 = vmatprep.subr.mxu0 0.0
    %1070 = vmatpush1.msra.mxu0 0.0
    %1071 = vmatprep.subr.mxu0 0.0
    %1072 = vmatpush1.msra.mxu0 0.0
    %1073 = vmatprep.subr.mxu0 0.0
    %1074 = vmatpush1.msra.mxu0 0.0
    %1075 = vmatprep.subr.mxu0 0.0
    %1076 = vmatpush1.msra.mxu0 0.0
    %1077 = vmatprep.subr.mxu0 0.0
    %1078 = vmatpush1.msra.mxu0 0.0
    %1079 = vmatprep.subr.mxu0 0.0
    %1080 = vmatpush1.msra.mxu0 0.0
    %1081 = vmatprep.subr.mxu0 0.0
    %1082 = vmatpush1.msra.mxu0 0.0
    %1083 = vmatprep.subr.mxu0 0.0
    %1084 = vmatpush1.msra.mxu0 0.0
    %1085 = vmatprep.subr.mxu0 0.0
    %1086 = vmatpush1.msra.mxu0 %v1037
    %1087 = vmatprep.subr.mxu0 0.0
    %1088 = vmatpush1.msra.mxu0 %v1036
    %1089 = vmatprep.subr.mxu0 0.0
    %1090 = vmatpush1.msra.mxu0 %v1035
    %1091 = vmatprep.subr.mxu0 0.0
    %1092 = vmatpush1.msra.mxu0 %v1034
    %1093 = vmatprep.subr.mxu0 0.0
    %1094 = vmatpush1.msra.mxu0 %v1033
    %1095 = vmatprep.subr.mxu0 0.0
    %1096 = vmatpush1.msra.mxu0 %v1032
    %1097 = vmatprep.subr.mxu0 0.0
    %1098 = vmatpush1.msra.mxu0 %v1031
    %1099 = vmatprep.subr.mxu0 0.0
    %1100 = vmatpush1.msra.mxu0 %v1030
    %1101 = vmatprep.subr.mxu0 0.0
    %1102 = vmatpush2.msra.mxu0 0.0
    %1103 = vmatprep.subr.mxu0 0.0
    %1104 = vmatpush2.msra.mxu0 0.0
    %1105 = vmatprep.subr.mxu0 0.0
    %1106 = vmatpush2.msra.mxu0 0.0
    %1107 = vmatprep.subr.mxu0 0.0
    %1108 = vmatpush2.msra.mxu0 0.0
    %1109 = vmatprep.subr.mxu0 0.0
    %1110 = vmatpush2.msra.mxu0 0.0
    %1111 = vmatprep.subr.mxu0 0.0
    %1112 = vmatpush2.msra.mxu0 0.0
    %1113 = vmatprep.subr.mxu0 0.0
    %1114 = vmatpush2.msra.mxu0 0.0
    %1115 = vmatprep.subr.mxu0 0.0
    %1116 = vmatpush2.msra.mxu0 0.0
    %1117 = vmatprep.subr.mxu0 0.0
    %1118 = vmatpush2.msra.mxu0 0.0
    %1119 = vmatprep.subr.mxu0 0.0
    %1120 = vmatpush2.msra.mxu0 0.0
    %1121 = vmatprep.subr.mxu0 0.0
    %1122 = vmatpush2.msra.mxu0 0.0
    %1123 = vmatprep.subr.mxu0 0.0
    %1124 = vmatpush2.msra.mxu0 0.0
    %1125 = vmatprep.subr.mxu0 0.0
    %1126 = vmatpush2.msra.mxu0 0.0
    %1127 = vmatprep.subr.mxu0 0.0
    %1128 = vmatpush2.msra.mxu0 0.0
    %1129 = vmatprep.subr.mxu0 0.0
    %1130 = vmatpush2.msra.mxu0 0.0
    %1131 = vmatprep.subr.mxu0 0.0
    %1132 = vmatpush2.msra.mxu0 0.0
    %1133 = vmatprep.mubr.f32.mxu0 0.0
    %1134 = vmatmul.mubr.f32.gmra.mxu0 %v1046
    %v1135 = vpop.f32.mrf.mxu0
    %v1136 = vadd.f32 %v1043, %v1135
    %v1137 = vpop.f32.mrf.mxu0
    %1138 = vmatprep.mubr.f32.mxu0 0.0
    %1139 = vmatmul.mubr.f32.gmra.mxu0 %v1049
    %v1140 = vpop.f32.mrf.mxu0
    %v1141 = vadd.f32 %v1043, %v1140
    %v1142 = vpop.f32.mrf.mxu0
    %1143 = vmatprep.mubr.f32.mxu0 0.0
    %1144 = vmatmul.mubr.f32.gmra.mxu0 %v1052
    %v1145 = vpop.f32.mrf.mxu0
    %v1146 = vadd.f32 %v1043, %v1145
    %v1147 = vpop.f32.mrf.mxu0
    %1148 = vmatprep.mubr.f32.mxu0 0.0
    %1149 = vmatmul.mubr.f32.gmra.mxu0 %v1055
    %v1150 = vpop.f32.mrf.mxu0
    %v1151 = vadd.f32 %v1043, %v1150
    %v1152 = vpop.f32.mrf.mxu0
    %1153 = vmatprep.mubr.f32.mxu0 0.0
    %1154 = vmatmul.mubr.f32.gmra.mxu0 %v1058
    %v1155 = vpop.f32.mrf.mxu0
    %v1156 = vadd.f32 %v1043, %v1155
    %v1157 = vpop.f32.mrf.mxu0
    %1158 = vmatprep.mubr.f32.mxu0 0.0
    %1159 = vmatmul.mubr.f32.gmra.mxu0 %v1061
    %v1160 = vpop.f32.mrf.mxu0
    %v1161 = vadd.f32 %v1043, %v1160
    %v1162 = vpop.f32.mrf.mxu0
    %1163 = vmatprep.mubr.f32.mxu0 0.0
    %1164 = vmatmul.mubr.f32.gmra.mxu0 %v1064
    %v1165 = vpop.f32.mrf.mxu0
    %v1166 = vadd.f32 %v1043, %v1165
    %v1167 = vpop.f32.mrf.mxu0
    %1168 = vmatprep.mubr.f32.mxu0 0.0
    %1169 = vmatmul.mubr.f32.gmra.mxu0 %v1067
    %v1170 = vpop.f32.mrf.mxu0
    %v1171 = vadd.f32 %v1043, %v1170
    %v1172 = vpop.f32.mrf.mxu0
    %1173 = vdwg.mxu0
    %vm1174 = vcmask 64512
    %1175 = vst.msk [vmem:[%s8] sm:$0xff] %vm1174, %v1136
    %1176 = vst.msk [vmem:[%s8 + $0x8] sm:$0xff] %vm1174, %v1141
    %1177 = vst.msk [vmem:[%s8 + $0x10] sm:$0xff] %vm1174, %v1146
    %1178 = vst.msk [vmem:[%s8 + $0x18] sm:$0xff] %vm1174, %v1151
    %1179 = vst.msk [vmem:[%s8 + $0x20] sm:$0xff] %vm1174, %v1156
    %1180 = vst.msk [vmem:[%s8 + $0x28] sm:$0xff] %vm1174, %v1161
    %1181 = vst.msk [vmem:[%s8 + $0x30] sm:$0xff] %vm1174, %v1166
    %1182 = vst.msk [vmem:[%s8 + $0x38] sm:$0xff] %vm1174, %v1171
    // Predicated region
    $region38: #{net_forward.1} parent=1 // pred_check
      _
    $region39: #{net_forward.1} parent=1 // pred_check_branch
      %1184 = sbr.rel (0) target = $region41
    $region40: #{net_forward.1} parent=1 // pred_region
      _
    $region41: #{net_forward.1} parent=1 // pred_fallthru
      _
    // Predicated region
    $region42: #{net_forward.1} parent=1 // pred_check
      _
    $region43: #{net_forward.1} parent=1 // pred_check_branch
      %1186 = sbr.rel (0) target = $region45
    $region44: #{net_forward.1} parent=1 // pred_region
      %s1188 = ssub.s32 32, 32
      %1189 = vsyncadd [#allocation5], %s1188
      %s1191 = sshll.u32 [#allocation6], 4
      %s1192 = int_to_ptr.vmem [resolvable:$true] %s1191
      %1194 = dma.vmem_to_hbm [thread:$0]  %s1192, 32, %s9, [#allocation5]
    $region45: #{net_forward.1} parent=1 // pred_fallthru
      _
    // Predicated region
    $region46: #{net_forward.1} parent=1 // pred_check
      _
    $region47: #{net_forward.1} parent=1 // pred_check_branch
      %1196 = sbr.rel (0) target = $region49
    $region48: #{net_forward.1} parent=1 // pred_region
      %s1198 = ssub.s32 32, 32
      %1199 = vsyncadd [#allocation8], %s1198
      %s1201 = sshll.u32 [#allocation7], 4
      %s1202 = int_to_ptr.vmem [resolvable:$true] %s1201
      %1204 = dma.vmem_to_hbm [thread:$0]  %s1202, 32, %s10, [#allocation8]
    $region49: #{net_forward.1} parent=1 // pred_fallthru
      _
    // Predicated region
    $region50: #{net_forward.1} parent=1 // pred_check
      _
    $region51: #{net_forward.1} parent=1 // pred_check_branch
      %1206 = sbr.rel (0) target = $region53
    $region52: #{net_forward.1} parent=1 // pred_region
      _
    $region53: #{net_forward.1} parent=1 // pred_fallthru
      _
    // Predicated region
    $region54: #{net_forward.1} parent=1 // pred_check
      _
    $region55: #{net_forward.1} parent=1 // pred_check_branch
      %1208 = sbr.rel (0) target = $region57
    $region56: #{net_forward.1} parent=1 // pred_region
      %1209 = dma.done [#allocation5], 32
    $region57: #{net_forward.1} parent=1 // pred_fallthru
      _
    // Predicated region
    $region58: #{net_forward.1} parent=1 // pred_check
      _
    $region59: #{net_forward.1} parent=1 // pred_check_branch
      %1211 = sbr.rel (0) target = $region61
    $region60: #{net_forward.1} parent=1 // pred_region
      %1212 = dma.done [#allocation8], 32
    $region61: #{net_forward.1} parent=1 // pred_fallthru
      _
    %1213 = vsyncpa [#allocation4], 1
    %1214 = vsyncpa [#allocation5], 1
    %1215 = vsyncpa [#allocation8], 1

</llo_original>
